<compile_context>
chip_gen: v5e
topology: v5e:2x2
jax: 0.10.0
libtpu: 0.0.40
codegen_flags: <defaults>
</compile_context>

<pallas_src>
import functools

import jax
import jax.numpy as jnp
from jax.experimental import pallas as pl
from jax.experimental.pallas import tpu as pltpu


_VMEM_LIMIT = 32 * 1024 * 1024   # conservative; safe on v5e / v6e / v7x
_HEAD_PAD = 128                  # lane-dense output slab width for narrow heads


# ----------------------------------------------------------------------------
# Pallas kernels
# ----------------------------------------------------------------------------
def _backbone_seg_gap_kernel(p_ref, bbw_ref, bbb_ref, segw_ref, segb_ref,
                             feat_ref, seg_ref, gap_ref, *, inv_s):
    """Fused: 3x3/s2 backbone conv (normalization folded) + ReLU, 1x1 seg head,
    and global-average-pool partial sums.  Grid = (batch, spatial_tiles); the
    GAP output block index is constant along the spatial axis, so it stays
    resident in VMEM as an accumulator."""
    s_idx = pl.program_id(1)

    patches = p_ref[0]                                            # (ts, 9*Cin) bf16
    feat = jnp.dot(patches, bbw_ref[...],
                   preferred_element_type=jnp.float32) + bbb_ref[...]
    feat = jnp.maximum(feat, 0.0)                                 # (ts, Cf) f32
    feat_bf = feat.astype(jnp.bfloat16)
    feat_ref[...] = feat_bf[None]

    seg = jnp.dot(feat_bf, segw_ref[...],
                  preferred_element_type=jnp.float32) + segb_ref[...]
    seg_ref[...] = seg[None]

    @pl.when(s_idx == 0)
    def _init():
        gap_ref[...] = jnp.zeros_like(gap_ref)

    # Partial GAP sum in f32; broadcast over the 8 sublane rows of the
    # accumulator block so the store stays a full (aligned) block write.
    psum = jnp.sum(feat, axis=0, keepdims=True) * inv_s           # (1, Cf) f32
    gap_ref[...] = gap_ref[...] + psum[None]


def _rpn_fused_kernel(fp_ref, rw_ref, rb_ref, hw_ref, hb_ref, out_ref,
                      *, ho, wo, cf):
    """RPN: 3x3 conv as a sum of 9 shifted matmuls over the padded feature map
    (no im2col slab in HBM) + ReLU + fused objectness/anchor-delta head with a
    lane-dense 128-wide output slab."""
    acc = jnp.zeros((ho * wo, cf), jnp.float32)
    for di in range(3):
        for dj in range(3):
            tap = fp_ref[0, di:di + ho, dj:dj + wo, :]            # (ho, wo, Cf) bf16
            tap2d = tap.reshape(ho * wo, cf)
            acc = acc + jnp.dot(tap2d, rw_ref[di * 3 + dj],
                                preferred_element_type=jnp.float32)
    hidden = jnp.maximum(acc + rb_ref[...], 0.0)
    out = jnp.dot(hidden.astype(jnp.bfloat16), hw_ref[...],
                  preferred_element_type=jnp.float32) + hb_ref[...]
    out_ref[...] = out[None]


def _roi_head_kernel(p_ref, fcw_ref, fcb_ref, hw_ref, hb_ref, out_ref):
    """ROI box head: FC + ReLU then fused cls/box head (lane-dense output)."""
    hidden = jnp.dot(p_ref[...].astype(jnp.bfloat16), fcw_ref[...],
                     preferred_element_type=jnp.float32) + fcb_ref[...]
    hidden = jnp.maximum(hidden, 0.0)
    out_ref[...] = jnp.dot(hidden.astype(jnp.bfloat16), hw_ref[...],
                           preferred_element_type=jnp.float32) + hb_ref[...]


# ----------------------------------------------------------------------------
# Pallas wrappers
# ----------------------------------------------------------------------------
def _pick_row_tile(s, max_rows=512):
    """Largest row tile <= max_rows that divides S and is sublane-aligned."""
    cap = min(s, max_rows)
    for t in range(cap, 15, -1):
        if s % t == 0 and t % 16 == 0:
            return t
    return s


def backbone_seg_gap(patches_bsk, bb_w, bb_b, seg_w, seg_b):
    B, S, Kp = patches_bsk.shape
    Cf = bb_w.shape[1]
    Ns = seg_w.shape[1]
    ts = _pick_row_tile(S)
    grid = (B, S // ts)

    feat, seg, gap = pl.pallas_call(
        functools.partial(_backbone_seg_gap_kernel, inv_s=1.0 / S),
        grid_spec=pltpu.PrefetchScalarGridSpec(
            num_scalar_prefetch=0,
            grid=grid,
            in_specs=[
                pl.BlockSpec((1, ts, Kp), lambda b, s: (b, s, 0)),
                pl.BlockSpec((Kp, Cf), lambda b, s: (0, 0)),
                pl.BlockSpec((1, Cf), lambda b, s: (0, 0)),
                pl.BlockSpec((Cf, Ns), lambda b, s: (0, 0)),
                pl.BlockSpec((1, Ns), lambda b, s: (0, 0)),
            ],
            out_specs=[
                pl.BlockSpec((1, ts, Cf), lambda b, s: (b, s, 0)),
                pl.BlockSpec((1, ts, Ns), lambda b, s: (b, s, 0)),
                pl.BlockSpec((1, 8, Cf), lambda b, s: (b, 0, 0)),  # GAP accum
            ],
        ),
        out_shape=(
            jax.ShapeDtypeStruct((B, S, Cf), jnp.bfloat16),
            jax.ShapeDtypeStruct((B, S, Ns), jnp.float32),
            jax.ShapeDtypeStruct((B, 8, Cf), jnp.float32),
        ),
        compiler_params=pltpu.CompilerParams(
            dimension_semantics=("parallel", "arbitrary"),
            vmem_limit_bytes=_VMEM_LIMIT),
    )(patches_bsk, bb_w, bb_b, seg_w, seg_b)
    pooled = gap[:, 0, :]                     # every sublane row holds the mean
    return feat, seg, pooled


def rpn_fused(feat_bhwc, rpn_w9, rpn_b, head_w, head_b):
    # TODO(synk): at real resolutions the spatial dims should also be tiled
    # (grid over Ho/Wo tiles with +1 halo rows/cols in the index_map); the toy
    # feature map fits one block per image.
    B, Ho, Wo, Cf = feat_bhwc.shape
    Nh = head_w.shape[1]
    featp = jnp.pad(feat_bhwc, ((0, 0), (1, 1), (1, 1), (0, 0)))

    return pl.pallas_call(
        functools.partial(_rpn_fused_kernel, ho=Ho, wo=Wo, cf=Cf),
        grid_spec=pltpu.PrefetchScalarGridSpec(
            num_scalar_prefetch=0,
            grid=(B,),
            in_specs=[
                pl.BlockSpec((1, Ho + 2, Wo + 2, Cf), lambda b: (b, 0, 0, 0)),
                pl.BlockSpec((9, Cf, Cf), lambda b: (0, 0, 0)),
                pl.BlockSpec((1, Cf), lambda b: (0, 0)),
                pl.BlockSpec((Cf, Nh), lambda b: (0, 0)),
                pl.BlockSpec((1, Nh), lambda b: (0, 0)),
            ],
            out_specs=pl.BlockSpec((1, Ho * Wo, Nh), lambda b: (b, 0, 0)),
        ),
        out_shape=jax.ShapeDtypeStruct((B, Ho * Wo, Nh), jnp.float32),
        compiler_params=pltpu.CompilerParams(
            dimension_semantics=("parallel",),
            vmem_limit_bytes=_VMEM_LIMIT),
    )(featp, rpn_w9, rpn_b, head_w, head_b)


def roi_head(pooled, fc_w, fc_b, head_w, head_b):
    B = pooled.shape[0]
    Nh = head_w.shape[1]
    return pl.pallas_call(
        _roi_head_kernel,
        out_shape=jax.ShapeDtypeStruct((B, Nh), jnp.float32),
        compiler_params=pltpu.CompilerParams(vmem_limit_bytes=_VMEM_LIMIT),
    )(pooled, fc_w, fc_b, head_w, head_b)


# ----------------------------------------------------------------------------
# Glue: im2col (backbone only; 3-channel input -> slab is small)
# ----------------------------------------------------------------------------
def im2col_nhwc(x, k, stride, pad, pad_value=None):
    """im2col; if pad_value (per-channel) is given, pad with it instead of 0."""
    B, H, W, C = x.shape
    if pad_value is None:
        xp = jnp.pad(x, ((0, 0), (pad, pad), (pad, pad), (0, 0)))
    else:
        pv = jnp.asarray(pad_value, x.dtype).reshape(1, 1, 1, C)
        xp = jnp.broadcast_to(pv, (B, H + 2 * pad, W + 2 * pad, C))
        xp = xp.at[:, pad:pad + H, pad:pad + W, :].set(x)
    Ho = (H + 2 * pad - k) // stride + 1
    Wo = (W + 2 * pad - k) // stride + 1
    cols = []
    for di in range(k):
        for dj in range(k):
            cols.append(
                xp[:, di:di + Ho * stride:stride, dj:dj + Wo * stride:stride, :])
    patches = jnp.concatenate(cols, axis=-1)          # (B, Ho, Wo, k*k*C)
    return patches.reshape(B * Ho * Wo, k * k * C), (B, Ho, Wo)


# ----------------------------------------------------------------------------
# Deterministic synthetic parameters + fused/folded parameter preparation
# ----------------------------------------------------------------------------
def make_params(key, cin=3, cfeat=32, n_sem_classes=8, n_anchors=3,
                roi_hidden=64, n_roi_classes=5):
    ks = jax.random.split(key, 12)
    s = 0.05
    return {
        "bb_w": jax.random.normal(ks[0], (3 * 3 * cin, cfeat), jnp.float32) * s,
        "bb_b": jnp.zeros((cfeat,), jnp.float32),
        "seg_w": jax.random.normal(ks[1], (cfeat, n_sem_classes), jnp.float32) * s,
        "seg_b": jnp.zeros((n_sem_classes,), jnp.float32),
        "rpn_w": jax.random.normal(ks[2], (3 * 3 * cfeat, cfeat), jnp.float32) * s,
        "rpn_b": jnp.zeros((cfeat,), jnp.float32),
        "obj_w": jax.random.normal(ks[3], (cfeat, n_anchors), jnp.float32) * s,
        "obj_b": jnp.zeros((n_anchors,), jnp.float32),
        "dlt_w": jax.random.normal(ks[4], (cfeat, 4 * n_anchors), jnp.float32) * s,
        "dlt_b": jnp.zeros((4 * n_anchors,), jnp.float32),
        "fc_w": jax.random.normal(ks[5], (cfeat, roi_hidden), jnp.float32) * s,
        "fc_b": jnp.zeros((roi_hidden,), jnp.float32),
        "cls_w": jax.random.normal(ks[6], (roi_hidden, n_roi_classes + 1),
                                   jnp.float32) * s,
        "cls_b": jnp.zeros((n_roi_classes + 1,), jnp.float32),
        "box_w": jax.random.normal(ks[7], (roi_hidden, 4 * n_roi_classes),
                                   jnp.float32) * s,
        "box_b": jnp.zeros((4 * n_roi_classes,), jnp.float32),
        "pixel_mean": jnp.array([103.53, 116.28, 123.675], jnp.float32),
        "pixel_std": jnp.array([57.375, 57.12, 58.395], jnp.float32),
    }


def prepare_fused_params(params):
    mean, std = params["pixel_mean"], params["pixel_std"]
    cf = params["bb_w"].shape[1]
    n_sem = params["seg_w"].shape[1]
    n_anchors = params["obj_w"].shape[1]
    n_roi_classes = params["cls_w"].shape[1] - 1

    # Fold (x - mean)/std into the 3x3 backbone conv.  Exact provided the raw
    # image is padded with pixel_mean (padded taps then contribute zero, which
    # matches zero-padding of the *normalized* input in the reference model).
    scale = jnp.tile(1.0 / std, 9)                     # (9*Cin,), tap-major rows
    shift = jnp.tile(mean / std, 9)
    bb_w_f = params["bb_w"] * scale[:, None]
    bb_b_f = params["bb_b"] - shift @ params["bb_w"]

    rpn_head_w = jnp.concatenate([params["obj_w"], params["dlt_w"]], axis=1)
    rpn_head_b = jnp.concatenate([params["obj_b"], params["dlt_b"]])
    roi_head_w = jnp.concatenate([params["cls_w"], params["box_w"]], axis=1)
    roi_head_b = jnp.concatenate([params["cls_b"], params["box_b"]])

    def pad_w(w):
        return jnp.pad(w, ((0, 0), (0, _HEAD_PAD - w.shape[1])))

    def pad_b(b):
        return jnp.pad(b, (0, _HEAD_PAD - b.shape[0])).reshape(1, _HEAD_PAD)

    arrays = {
        "pixel_mean": mean,
        "bb_w": bb_w_f.astype(jnp.bfloat16),
        "bb_b": bb_b_f.reshape(1, cf),
        "seg_w": params["seg_w"].astype(jnp.bfloat16),
        "seg_b": params["seg_b"].reshape(1, n_sem),
        "rpn_w": params["rpn_w"].reshape(9, cf, cf).astype(jnp.bfloat16),
        "rpn_b": params["rpn_b"].reshape(1, cf),
        "rpn_head_w": pad_w(rpn_head_w).astype(jnp.bfloat16),
        "rpn_head_b": pad_b(rpn_head_b),
        "fc_w": params["fc_w"].astype(jnp.bfloat16),
        "fc_b": params["fc_b"].reshape(1, -1),
        "roi_head_w": pad_w(roi_head_w).astype(jnp.bfloat16),
        "roi_head_b": pad_b(roi_head_b),
    }
    cfg = {"n_sem": n_sem, "n_anchors": n_anchors,
           "n_roi_classes": n_roi_classes}
    return arrays, cfg


# ----------------------------------------------------------------------------
# Forward pass (eval path of DetectionAndSegmentation)
# ----------------------------------------------------------------------------
def detection_and_segmentation_forward(images_nchw, fp, *, n_sem, n_anchors,
                                        n_roi_classes):
    B, Cin, H, W = images_nchw.shape
    x = jnp.transpose(images_nchw, (0, 2, 3, 1))                  # NCHW -> NHWC

    # --- preprocess_image: folded into the backbone conv weights/bias --------
    # TODO(synk): ImageList padding to size_divisibility is a layout op; inputs
    # here are already divisible, so it is a no-op.
    patches, (_, Ho, Wo) = im2col_nhwc(x, k=3, stride=2, pad=1,
                                       pad_value=fp["pixel_mean"])
    S = Ho * Wo
    patches = patches.astype(jnp.bfloat16).reshape(B, S, 9 * Cin)

    # --- backbone + sem_seg head + GAP, fused in one pallas_call --------------
    feat, seg2d, pooled = backbone_seg_gap(
        patches, fp["bb_w"], fp["bb_b"], fp["seg_w"], fp["seg_b"])
    Cf = feat.shape[-1]

    seg = seg2d.reshape(B, Ho, Wo, n_sem)
    seg_full = jax.image.resize(seg, (B, H, W, n_sem), method="bilinear")
    sem_seg_results = jnp.transpose(seg_full, (0, 3, 1, 2))       # NCHW
    # TODO(synk): per-image crop in sem_seg_postprocess is data-dependent; all
    # images share (H, W) here so the bilinear resize suffices.

    # --- proposal_generator (RPN): fused conv + obj/delta head ---------------
    feat_bhwc = feat.reshape(B, Ho, Wo, Cf)
    rpn_out = rpn_fused(feat_bhwc, fp["rpn_w"], fp["rpn_b"],
                        fp["rpn_head_w"], fp["rpn_head_b"])
    A = n_anchors
    objectness = rpn_out[..., :A].reshape(B, Ho, Wo, A)
    anchor_deltas = rpn_out[..., A:5 * A].reshape(B, Ho, Wo, 4 * A)
    # TODO(synk): anchor decoding + NMS to build Instances is data-dependent.

    # --- roi_heads (simplified box head over globally pooled features) -------
    roi_out = roi_head(pooled, fp["fc_w"], fp["fc_b"],
                       fp["roi_head_w"], fp["roi_head_b"])
    nc1 = n_roi_classes + 1
    class_logits = roi_out[:, :nc1]
    box_deltas = roi_out[:, nc1:nc1 + 4 * n_roi_classes]
    # TODO(synk): ROIAlign per-proposal crops and detector_postprocess NMS /
    # box rescaling are data-dependent gather ops; not expressed in Pallas.

    return {
        "sem_seg": sem_seg_results,
        "proposals": {
            "objectness_logits": objectness,
            "anchor_deltas": anchor_deltas,
        },
        "instances": {
            "class_logits": class_logits,
            "box_deltas": box_deltas,
        },
    }


# ----------------------------------------------------------------------------
# Pure-JAX reference (original, un-fused semantics) for numerical checking
# ----------------------------------------------------------------------------
def reference_forward(images_nchw, params):
    B, Cin, H, W = images_nchw.shape
    x = jnp.transpose(images_nchw, (0, 2, 3, 1))
    mean = params["pixel_mean"].reshape(1, 1, 1, Cin)
    std = params["pixel_std"].reshape(1, 1, 1, Cin)
    xn = (x - mean) / std
    patches, (_, Ho, Wo) = im2col_nhwc(xn, 3, 2, 1)
    feat2d = jnp.maximum(patches @ params["bb_w"] + params["bb_b"], 0.0)
    Cf = feat2d.shape[-1]
    seg2d = feat2d @ params["seg_w"] + params["seg_b"]
    n_sem = seg2d.shape[-1]
    seg = seg2d.reshape(B, Ho, Wo, n_sem)
    sem_seg = jnp.transpose(
        jax.image.resize(seg, (B, H, W, n_sem), method="bilinear"), (0, 3, 1, 2))
    feat = feat2d.reshape(B, Ho, Wo, Cf)
    rp, _ = im2col_nhwc(feat, 3, 1, 1)
    rh = jnp.maximum(rp @ params["rpn_w"] + params["rpn_b"], 0.0)
    obj = (rh @ params["obj_w"] + params["obj_b"]).reshape(B, Ho, Wo, -1)
    dlt = (rh @ params["dlt_w"] + params["dlt_b"]).reshape(B, Ho, Wo, -1)
    pooled = feat2d.reshape(B, Ho * Wo, Cf).mean(axis=1)
    hid = jnp.maximum(pooled @ params["fc_w"] + params["fc_b"], 0.0)
    cls = hid @ params["cls_w"] + params["cls_b"]
    box = hid @ params["box_w"] + params["box_b"]
    return sem_seg, obj, dlt, cls, box


# ----------------------------------------------------------------------------
if __name__ == "__main__":
    key = jax.random.PRNGKey(0)
    k_img, k_par = jax.random.split(key)

    B, Cin, H, W = 2, 3, 16, 16
    images = jax.random.uniform(k_img, (B, Cin, H, W), jnp.float32) * 255.0
    params = make_params(k_par, cin=Cin)
    fused, cfg = prepare_fused_params(params)

    fwd = jax.jit(functools.partial(detection_and_segmentation_forward, **cfg))
    out = fwd(images, fused)
    out = jax.tree_util.tree_map(jax.block_until_ready, out)

    # shape checks (same contract as the PyTorch eval path, toy config)
    assert out["sem_seg"].shape == (B, 8, H, W)
    assert out["proposals"]["objectness_logits"].shape == (B, 8, 8, 3)
    assert out["proposals"]["anchor_deltas"].shape == (B, 8, 8, 12)
    assert out["instances"]["class_logits"].shape == (B, 6)
    assert out["instances"]["box_deltas"].shape == (B, 20)

    # numerical check vs. the un-fused f32 reference (bf16 MXU inputs -> loose tol)
    ref = reference_forward(images, params)
    got = (out["sem_seg"],
           out["proposals"]["objectness_logits"],
           out["proposals"]["anchor_deltas"],
           out["instances"]["class_logits"],
           out["instances"]["box_deltas"])
    for g, r in zip(got, ref):
        assert bool(jnp.allclose(g, r, rtol=1e-1, atol=5e-2)), \
            f"max abs err = {float(jnp.max(jnp.abs(g - r)))}"

    print("KERNEL_OK")
</pallas_src>

<mosaic_0001>
module attributes {stable_mosaic.version = 11 : i64} {
  func.func @_backbone_seg_gap_kernel(%arg0: i32, %arg1: i32, %arg2: memref<1x64x27xbf16, #tpu.memory_space<vmem>>, %arg3: memref<27x32xbf16, #tpu.memory_space<vmem>>, %arg4: memref<1x32xf32, #tpu.memory_space<vmem>>, %arg5: memref<32x8xbf16, #tpu.memory_space<vmem>>, %arg6: memref<1x8xf32, #tpu.memory_space<vmem>>, %arg7: memref<1x64x32xbf16, #tpu.memory_space<vmem>>, %arg8: memref<1x64x8xf32, #tpu.memory_space<vmem>>, %arg9: memref<1x8x32xf32, #tpu.memory_space<vmem>>) attributes {dimension_semantics = [#tpu.dimension_semantics<parallel>, #tpu.dimension_semantics<arbitrary>], iteration_bounds = array<i64: 2, 1>, scalar_prefetch = 0 : i64, scratch_operands = 0 : i64, tpu.core_type = #tpu.core_type<tc>, window_params = [{transform_indices = @transform_0, window_bounds = array<i64: 1, 64, 27>}, {pipeline_mode = #tpu.pipeline_mode<synchronous>, transform_indices = @transform_1, window_bounds = array<i64: 27, 32>}, {pipeline_mode = #tpu.pipeline_mode<synchronous>, transform_indices = @transform_2, window_bounds = array<i64: 1, 32>}, {pipeline_mode = #tpu.pipeline_mode<synchronous>, transform_indices = @transform_3, window_bounds = array<i64: 32, 8>}, {pipeline_mode = #tpu.pipeline_mode<synchronous>, transform_indices = @transform_4, window_bounds = array<i64: 1, 8>}, {transform_indices = @transform_5, window_bounds = array<i64: 1, 64, 32>}, {transform_indices = @transform_6, window_bounds = array<i64: 1, 64, 8>}, {transform_indices = @transform_7, window_bounds = array<i64: 1, 8, 32>}]} {
    %c0 = arith.constant 0 : index
    %c0_0 = arith.constant 0 : index
    %c0_1 = arith.constant 0 : index
    %0 = vector.load %arg2[%c0, %c0_0, %c0_1] : memref<1x64x27xbf16, #tpu.memory_space<vmem>>, vector<1x64x27xbf16>
    %1 = vector.shape_cast %0 : vector<1x64x27xbf16> to vector<64x27xbf16>
    %c0_2 = arith.constant 0 : index
    %c0_3 = arith.constant 0 : index
    %2 = vector.load %arg3[%c0_2, %c0_3] : memref<27x32xbf16, #tpu.memory_space<vmem>>, vector<27x32xbf16>
    %cst = arith.constant dense<0.000000e+00> : vector<64x32xf32>
    %3 = tpu.matmul %1, %2, %cst {dimension_numbers = #tpu.dot_dimension_numbers<[1], [0], [0], [1], [0, 0, 1, 1], [], []>} : vector<64x27xbf16>, vector<27x32xbf16>, vector<64x32xf32> -> vector<64x32xf32>
    %c0_4 = arith.constant 0 : index
    %c0_5 = arith.constant 0 : index
    %4 = vector.load %arg4[%c0_4, %c0_5] : memref<1x32xf32, #tpu.memory_space<vmem>>, vector<1x32xf32>
    %5 = vector.broadcast %4 : vector<1x32xf32> to vector<64x32xf32>
    %6 = arith.addf %3, %5 : vector<64x32xf32>
    %cst_6 = arith.constant 0.000000e+00 : f32
    %7 = vector.broadcast %cst_6 : f32 to vector<64x32xf32>
    %8 = arith.maximumf %6, %7 : vector<64x32xf32>
    %9 = arith.truncf %8 : vector<64x32xf32> to vector<64x32xbf16>
    %10 = vector.shape_cast %9 : vector<64x32xbf16> to vector<1x64x32xbf16>
    %c0_7 = arith.constant 0 : index
    %c0_8 = arith.constant 0 : index
    %c0_9 = arith.constant 0 : index
    %11 = vector.load %arg7[%c0_7, %c0_8, %c0_9] : memref<1x64x32xbf16, #tpu.memory_space<vmem>>, vector<1x64x32xbf16>
    tpu.vector_store %arg7[%c0_7, %c0_8, %c0_9], %10 {strides = array<i32>} : memref<1x64x32xbf16, #tpu.memory_space<vmem>>, vector<1x64x32xbf16>,
    %c0_10 = arith.constant 0 : index
    %c0_11 = arith.constant 0 : index
    %12 = vector.load %arg5[%c0_10, %c0_11] : memref<32x8xbf16, #tpu.memory_space<vmem>>, vector<32x8xbf16>
    %cst_12 = arith.constant dense<0.000000e+00> : vector<64x8xf32>
    %13 = tpu.matmul %9, %12, %cst_12 {dimension_numbers = #tpu.dot_dimension_numbers<[1], [0], [0], [1], [0, 0, 1, 1], [], []>} : vector<64x32xbf16>, vector<32x8xbf16>, vector<64x8xf32> -> vector<64x8xf32>
    %c0_13 = arith.constant 0 : index
    %c0_14 = arith.constant 0 : index
    %14 = vector.load %arg6[%c0_13, %c0_14] : memref<1x8xf32, #tpu.memory_space<vmem>>, vector<1x8xf32>
    %15 = vector.broadcast %14 : vector<1x8xf32> to vector<64x8xf32>
    %16 = arith.addf %13, %15 : vector<64x8xf32>
    %17 = vector.shape_cast %16 : vector<64x8xf32> to vector<1x64x8xf32>
    %c0_15 = arith.constant 0 : index
    %c0_16 = arith.constant 0 : index
    %c0_17 = arith.constant 0 : index
    %18 = vector.load %arg8[%c0_15, %c0_16, %c0_17] : memref<1x64x8xf32, #tpu.memory_space<vmem>>, vector<1x64x8xf32>
    tpu.vector_store %arg8[%c0_15, %c0_16, %c0_17], %17 {strides = array<i32>} : memref<1x64x8xf32, #tpu.memory_space<vmem>>, vector<1x64x8xf32>,
    %c0_i32 = arith.constant 0 : i32
    %19 = arith.cmpi eq, %arg1, %c0_i32 : i32
    %20 = arith.extui %19 : i1 to i32
    %c0_i32_18 = arith.constant 0 : i32
    %21 = arith.cmpi ne, %20, %c0_i32_18 : i32
    scf.if %21 {
      %cst_27 = arith.constant 0.000000e+00 : f32
      %31 = vector.broadcast %cst_27 : f32 to vector<1x8x32xf32>
      %c0_28 = arith.constant 0 : index
      %c0_29 = arith.constant 0 : index
      %c0_30 = arith.constant 0 : index
      %32 = vector.load %arg9[%c0_28, %c0_29, %c0_30] : memref<1x8x32xf32, #tpu.memory_space<vmem>>, vector<1x8x32xf32>
      tpu.vector_store %arg9[%c0_28, %c0_29, %c0_30], %31 {strides = array<i32>} : memref<1x8x32xf32, #tpu.memory_space<vmem>>, vector<1x8x32xf32>,
    } else {
    }
    %cst_19 = arith.constant dense<0.000000e+00> : vector<32xf32>
    %22 = vector.multi_reduction <add>, %8, %cst_19 [0] : vector<64x32xf32> to vector<32xf32>
    %23 = vector.shape_cast %22 : vector<32xf32> to vector<1x32xf32>
    %cst_20 = arith.constant 1.562500e-02 : f32
    %24 = vector.broadcast %cst_20 : f32 to vector<1x32xf32>
    %25 = arith.mulf %23, %24 : vector<1x32xf32>
    %c0_21 = arith.constant 0 : index
    %c0_22 = arith.constant 0 : index
    %c0_23 = arith.constant 0 : index
    %26 = vector.load %arg9[%c0_21, %c0_22, %c0_23] : memref<1x8x32xf32, #tpu.memory_space<vmem>>, vector<1x8x32xf32>
    %27 = vector.shape_cast %25 : vector<1x32xf32> to vector<1x1x32xf32>
    %28 = vector.broadcast %27 : vector<1x1x32xf32> to vector<1x8x32xf32>
    %29 = arith.addf %26, %28 : vector<1x8x32xf32>
    %c0_24 = arith.constant 0 : index
    %c0_25 = arith.constant 0 : index
    %c0_26 = arith.constant 0 : index
    %30 = vector.load %arg9[%c0_24, %c0_25, %c0_26] : memref<1x8x32xf32, #tpu.memory_space<vmem>>, vector<1x8x32xf32>
    tpu.vector_store %arg9[%c0_24, %c0_25, %c0_26], %29 {strides = array<i32>} : memref<1x8x32xf32, #tpu.memory_space<vmem>>, vector<1x8x32xf32>,
    return
  }
  func.func @transform_0(%arg0: i32, %arg1: i32) -> (i32, i32, i32) {
    %c0_i32 = arith.constant 0 : i32
    %c0_i32_0 = arith.constant 0 : i32
    return %arg0, %arg1, %c0_i32 : i32, i32, i32
  }
  func.func @transform_1(%arg0: i32, %arg1: i32) -> (i32, i32) {
    %c0_i32 = arith.constant 0 : i32
    %c0_i32_0 = arith.constant 0 : i32
    %c0_i32_1 = arith.constant 0 : i32
    return %c0_i32, %c0_i32_0 : i32, i32
  }
  func.func @transform_2(%arg0: i32, %arg1: i32) -> (i32, i32) {
    %c0_i32 = arith.constant 0 : i32
    %c0_i32_0 = arith.constant 0 : i32
    %c0_i32_1 = arith.constant 0 : i32
    return %c0_i32, %c0_i32_0 : i32, i32
  }
  func.func @transform_3(%arg0: i32, %arg1: i32) -> (i32, i32) {
    %c0_i32 = arith.constant 0 : i32
    %c0_i32_0 = arith.constant 0 : i32
    %c0_i32_1 = arith.constant 0 : i32
    return %c0_i32, %c0_i32_0 : i32, i32
  }
  func.func @transform_4(%arg0: i32, %arg1: i32) -> (i32, i32) {
    %c0_i32 = arith.constant 0 : i32
    %c0_i32_0 = arith.constant 0 : i32
    %c0_i32_1 = arith.constant 0 : i32
    return %c0_i32, %c0_i32_0 : i32, i32
  }
  func.func @transform_5(%arg0: i32, %arg1: i32) -> (i32, i32, i32) {
    %c0_i32 = arith.constant 0 : i32
    %c0_i32_0 = arith.constant 0 : i32
    return %arg0, %arg1, %c0_i32 : i32, i32, i32
  }
  func.func @transform_6(%arg0: i32, %arg1: i32) -> (i32, i32, i32) {
    %c0_i32 = arith.constant 0 : i32
    %c0_i32_0 = arith.constant 0 : i32
    return %arg0, %arg1, %c0_i32 : i32, i32, i32
  }
  func.func @transform_7(%arg0: i32, %arg1: i32) -> (i32, i32, i32) {
    %c0_i32 = arith.constant 0 : i32
    %c0_i32_0 = arith.constant 0 : i32
    %c0_i32_1 = arith.constant 0 : i32
    return %arg0, %c0_i32, %c0_i32_0 : i32, i32, i32
  }
}

module attributes {stable_mosaic.version = 11 : i64} {
  func.func @_rpn_fused_kernel(%arg0: i32, %arg1: memref<1x10x10x32xbf16, #tpu.memory_space<vmem>>, %arg2: memref<9x32x32xbf16, #tpu.memory_space<vmem>>, %arg3: memref<1x32xf32, #tpu.memory_space<vmem>>, %arg4: memref<32x128xbf16, #tpu.memory_space<vmem>>, %arg5: memref<1x128xf32, #tpu.memory_space<vmem>>, %arg6: memref<1x64x128xf32, #tpu.memory_space<vmem>>) attributes {dimension_semantics = [#tpu.dimension_semantics<parallel>], iteration_bounds = array<i64: 2>, scalar_prefetch = 0 : i64, scratch_operands = 0 : i64, tpu.core_type = #tpu.core_type<tc>, window_params = [{transform_indices = @transform_0, window_bounds = array<i64: 1, 10, 10, 32>}, {pipeline_mode = #tpu.pipeline_mode<synchronous>, transform_indices = @transform_1, window_bounds = array<i64: 9, 32, 32>}, {pipeline_mode = #tpu.pipeline_mode<synchronous>, transform_indices = @transform_2, window_bounds = array<i64: 1, 32>}, {pipeline_mode = #tpu.pipeline_mode<synchronous>, transform_indices = @transform_3, window_bounds = array<i64: 32, 128>}, {pipeline_mode = #tpu.pipeline_mode<synchronous>, transform_indices = @transform_4, window_bounds = array<i64: 1, 128>}, {transform_indices = @transform_5, window_bounds = array<i64: 1, 64, 128>}]} {
    %cst = arith.constant 0.000000e+00 : f32
    %0 = vector.broadcast %cst : f32 to vector<64x32xf32>
    %c0 = arith.constant 0 : index
    %c0_0 = arith.constant 0 : index
    %c0_1 = arith.constant 0 : index
    %c0_2 = arith.constant 0 : index
    %1 = vector.load %arg1[%c0, %c0_0, %c0_1, %c0_2] : memref<1x10x10x32xbf16, #tpu.memory_space<vmem>>, vector<1x8x8x32xbf16>
    %2 = vector.shape_cast %1 : vector<1x8x8x32xbf16> to vector<8x8x32xbf16>
    %3 = vector.shape_cast %2 : vector<8x8x32xbf16> to vector<64x32xbf16>
    %c0_3 = arith.constant 0 : index
    %c0_4 = arith.constant 0 : index
    %c0_5 = arith.constant 0 : index
    %4 = vector.load %arg2[%c0_3, %c0_4, %c0_5] : memref<9x32x32xbf16, #tpu.memory_space<vmem>>, vector<1x32x32xbf16>
    %5 = vector.shape_cast %4 : vector<1x32x32xbf16> to vector<32x32xbf16>
    %cst_6 = arith.constant dense<0.000000e+00> : vector<64x32xf32>
    %6 = tpu.matmul %3, %5, %cst_6 {dimension_numbers = #tpu.dot_dimension_numbers<[1], [0], [0], [1], [0, 0, 1, 1], [], []>} : vector<64x32xbf16>, vector<32x32xbf16>, vector<64x32xf32> -> vector<64x32xf32>
    %7 = arith.addf %0, %6 : vector<64x32xf32>
    %c0_7 = arith.constant 0 : index
    %c0_8 = arith.constant 0 : index
    %c1 = arith.constant 1 : index
    %c0_9 = arith.constant 0 : index
    %8 = vector.load %arg1[%c0_7, %c0_8, %c1, %c0_9] : memref<1x10x10x32xbf16, #tpu.memory_space<vmem>>, vector<1x8x8x32xbf16>
    %9 = vector.shape_cast %8 : vector<1x8x8x32xbf16> to vector<8x8x32xbf16>
    %10 = vector.shape_cast %9 : vector<8x8x32xbf16> to vector<64x32xbf16>
    %c1_10 = arith.constant 1 : index
    %c0_11 = arith.constant 0 : index
    %c0_12 = arith.constant 0 : index
    %11 = vector.load %arg2[%c1_10, %c0_11, %c0_12] : memref<9x32x32xbf16, #tpu.memory_space<vmem>>, vector<1x32x32xbf16>
    %12 = vector.shape_cast %11 : vector<1x32x32xbf16> to vector<32x32xbf16>
    %cst_13 = arith.constant dense<0.000000e+00> : vector<64x32xf32>
    %13 = tpu.matmul %10, %12, %cst_13 {dimension_numbers = #tpu.dot_dimension_numbers<[1], [0], [0], [1], [0, 0, 1, 1], [], []>} : vector<64x32xbf16>, vector<32x32xbf16>, vector<64x32xf32> -> vector<64x32xf32>
    %14 = arith.addf %7, %13 : vector<64x32xf32>
    %c0_14 = arith.constant 0 : index
    %c0_15 = arith.constant 0 : index
    %c2 = arith.constant 2 : index
    %c0_16 = arith.constant 0 : index
    %15 = vector.load %arg1[%c0_14, %c0_15, %c2, %c0_16] : memref<1x10x10x32xbf16, #tpu.memory_space<vmem>>, vector<1x8x8x32xbf16>
    %16 = vector.shape_cast %15 : vector<1x8x8x32xbf16> to vector<8x8x32xbf16>
    %17 = vector.shape_cast %16 : vector<8x8x32xbf16> to vector<64x32xbf16>
    %c2_17 = arith.constant 2 : index
    %c0_18 = arith.constant 0 : index
    %c0_19 = arith.constant 0 : index
    %18 = vector.load %arg2[%c2_17, %c0_18, %c0_19] : memref<9x32x32xbf16, #tpu.memory_space<vmem>>, vector<1x32x32xbf16>
    %19 = vector.shape_cast %18 : vector<1x32x32xbf16> to vector<32x32xbf16>
    %cst_20 = arith.constant dense<0.000000e+00> : vector<64x32xf32>
    %20 = tpu.matmul %17, %19, %cst_20 {dimension_numbers = #tpu.dot_dimension_numbers<[1], [0], [0], [1], [0, 0, 1, 1], [], []>} : vector<64x32xbf16>, vector<32x32xbf16>, vector<64x32xf32> -> vector<64x32xf32>
    %21 = arith.addf %14, %20 : vector<64x32xf32>
    %c0_21 = arith.constant 0 : index
    %c1_22 = arith.constant 1 : index
    %c0_23 = arith.constant 0 : index
    %c0_24 = arith.constant 0 : index
    %22 = vector.load %arg1[%c0_21, %c1_22, %c0_23, %c0_24] : memref<1x10x10x32xbf16, #tpu.memory_space<vmem>>, vector<1x8x8x32xbf16>
    %23 = vector.shape_cast %22 : vector<1x8x8x32xbf16> to vector<8x8x32xbf16>
    %24 = vector.shape_cast %23 : vector<8x8x32xbf16> to vector<64x32xbf16>
    %c3 = arith.constant 3 : index
    %c0_25 = arith.constant 0 : index
    %c0_26 = arith.constant 0 : index
    %25 = vector.load %arg2[%c3, %c0_25, %c0_26] : memref<9x32x32xbf16, #tpu.memory_space<vmem>>, vector<1x32x32xbf16>
    %26 = vector.shape_cast %25 : vector<1x32x32xbf16> to vector<32x32xbf16>
    %cst_27 = arith.constant dense<0.000000e+00> : vector<64x32xf32>
    %27 = tpu.matmul %24, %26, %cst_27 {dimension_numbers = #tpu.dot_dimension_numbers<[1], [0], [0], [1], [0, 0, 1, 1], [], []>} : vector<64x32xbf16>, vector<32x32xbf16>, vector<64x32xf32> -> vector<64x32xf32>
    %28 = arith.addf %21, %27 : vector<64x32xf32>
    %c0_28 = arith.constant 0 : index
    %c1_29 = arith.constant 1 : index
    %c1_30 = arith.constant 1 : index
    %c0_31 = arith.constant 0 : index
    %29 = vector.load %arg1[%c0_28, %c1_29, %c1_30, %c0_31] : memref<1x10x10x32xbf16, #tpu.memory_space<vmem>>, vector<1x8x8x32xbf16>
    %30 = vector.shape_cast %29 : vector<1x8x8x32xbf16> to vector<8x8x32xbf16>
    %31 = vector.shape_cast %30 : vector<8x8x32xbf16> to vector<64x32xbf16>
    %c4 = arith.constant 4 : index
    %c0_32 = arith.constant 0 : index
    %c0_33 = arith.constant 0 : index
    %32 = vector.load %arg2[%c4, %c0_32, %c0_33] : memref<9x32x32xbf16, #tpu.memory_space<vmem>>, vector<1x32x32xbf16>
    %33 = vector.shape_cast %32 : vector<1x32x32xbf16> to vector<32x32xbf16>
    %cst_34 = arith.constant dense<0.000000e+00> : vector<64x32xf32>
    %34 = tpu.matmul %31, %33, %cst_34 {dimension_numbers = #tpu.dot_dimension_numbers<[1], [0], [0], [1], [0, 0, 1, 1], [], []>} : vector<64x32xbf16>, vector<32x32xbf16>, vector<64x32xf32> -> vector<64x32xf32>
    %35 = arith.addf %28, %34 : vector<64x32xf32>
    %c0_35 = arith.constant 0 : index
    %c1_36 = arith.constant 1 : index
    %c2_37 = arith.constant 2 : index
    %c0_38 = arith.constant 0 : index
    %36 = vector.load %arg1[%c0_35, %c1_36, %c2_37, %c0_38] : memref<1x10x10x32xbf16, #tpu.memory_space<vmem>>, vector<1x8x8x32xbf16>
    %37 = vector.shape_cast %36 : vector<1x8x8x32xbf16> to vector<8x8x32xbf16>
    %38 = vector.shape_cast %37 : vector<8x8x32xbf16> to vector<64x32xbf16>
    %c5 = arith.constant 5 : index
    %c0_39 = arith.constant 0 : index
    %c0_40 = arith.constant 0 : index
    %39 = vector.load %arg2[%c5, %c0_39, %c0_40] : memref<9x32x32xbf16, #tpu.memory_space<vmem>>, vector<1x32x32xbf16>
    %40 = vector.shape_cast %39 : vector<1x32x32xbf16> to vector<32x32xbf16>
    %cst_41 = arith.constant dense<0.000000e+00> : vector<64x32xf32>
    %41 = tpu.matmul %38, %40, %cst_41 {dimension_numbers = #tpu.dot_dimension_numbers<[1], [0], [0], [1], [0, 0, 1, 1], [], []>} : vector<64x32xbf16>, vector<32x32xbf16>, vector<64x32xf32> -> vector<64x32xf32>
    %42 = arith.addf %35, %41 : vector<64x32xf32>
    %c0_42 = arith.constant 0 : index
    %c2_43 = arith.constant 2 : index
    %c0_44 = arith.constant 0 : index
    %c0_45 = arith.constant 0 : index
    %43 = vector.load %arg1[%c0_42, %c2_43, %c0_44, %c0_45] : memref<1x10x10x32xbf16, #tpu.memory_space<vmem>>, vector<1x8x8x32xbf16>
    %44 = vector.shape_cast %43 : vector<1x8x8x32xbf16> to vector<8x8x32xbf16>
    %45 = vector.shape_cast %44 : vector<8x8x32xbf16> to vector<64x32xbf16>
    %c6 = arith.constant 6 : index
    %c0_46 = arith.constant 0 : index
    %c0_47 = arith.constant 0 : index
    %46 = vector.load %arg2[%c6, %c0_46, %c0_47] : memref<9x32x32xbf16, #tpu.memory_space<vmem>>, vector<1x32x32xbf16>
    %47 = vector.shape_cast %46 : vector<1x32x32xbf16> to vector<32x32xbf16>
    %cst_48 = arith.constant dense<0.000000e+00> : vector<64x32xf32>
    %48 = tpu.matmul %45, %47, %cst_48 {dimension_numbers = #tpu.dot_dimension_numbers<[1], [0], [0], [1], [0, 0, 1, 1], [], []>} : vector<64x32xbf16>, vector<32x32xbf16>, vector<64x32xf32> -> vector<64x32xf32>
    %49 = arith.addf %42, %48 : vector<64x32xf32>
    %c0_49 = arith.constant 0 : index
    %c2_50 = arith.constant 2 : index
    %c1_51 = arith.constant 1 : index
    %c0_52 = arith.constant 0 : index
    %50 = vector.load %arg1[%c0_49, %c2_50, %c1_51, %c0_52] : memref<1x10x10x32xbf16, #tpu.memory_space<vmem>>, vector<1x8x8x32xbf16>
    %51 = vector.shape_cast %50 : vector<1x8x8x32xbf16> to vector<8x8x32xbf16>
    %52 = vector.shape_cast %51 : vector<8x8x32xbf16> to vector<64x32xbf16>
    %c7 = arith.constant 7 : index
    %c0_53 = arith.constant 0 : index
    %c0_54 = arith.constant 0 : index
    %53 = vector.load %arg2[%c7, %c0_53, %c0_54] : memref<9x32x32xbf16, #tpu.memory_space<vmem>>, vector<1x32x32xbf16>
    %54 = vector.shape_cast %53 : vector<1x32x32xbf16> to vector<32x32xbf16>
    %cst_55 = arith.constant dense<0.000000e+00> : vector<64x32xf32>
    %55 = tpu.matmul %52, %54, %cst_55 {dimension_numbers = #tpu.dot_dimension_numbers<[1], [0], [0], [1], [0, 0, 1, 1], [], []>} : vector<64x32xbf16>, vector<32x32xbf16>, vector<64x32xf32> -> vector<64x32xf32>
    %56 = arith.addf %49, %55 : vector<64x32xf32>
    %c0_56 = arith.constant 0 : index
    %c2_57 = arith.constant 2 : index
    %c2_58 = arith.constant 2 : index
    %c0_59 = arith.constant 0 : index
    %57 = vector.load %arg1[%c0_56, %c2_57, %c2_58, %c0_59] : memref<1x10x10x32xbf16, #tpu.memory_space<vmem>>, vector<1x8x8x32xbf16>
    %58 = vector.shape_cast %57 : vector<1x8x8x32xbf16> to vector<8x8x32xbf16>
    %59 = vector.shape_cast %58 : vector<8x8x32xbf16> to vector<64x32xbf16>
    %c8 = arith.constant 8 : index
    %c0_60 = arith.constant 0 : index
    %c0_61 = arith.constant 0 : index
    %60 = vector.load %arg2[%c8, %c0_60, %c0_61] : memref<9x32x32xbf16, #tpu.memory_space<vmem>>, vector<1x32x32xbf16>
    %61 = vector.shape_cast %60 : vector<1x32x32xbf16> to vector<32x32xbf16>
    %cst_62 = arith.constant dense<0.000000e+00> : vector<64x32xf32>
    %62 = tpu.matmul %59, %61, %cst_62 {dimension_numbers = #tpu.dot_dimension_numbers<[1], [0], [0], [1], [0, 0, 1, 1], [], []>} : vector<64x32xbf16>, vector<32x32xbf16>, vector<64x32xf32> -> vector<64x32xf32>
    %63 = arith.addf %56, %62 : vector<64x32xf32>
    %c0_63 = arith.constant 0 : index
    %c0_64 = arith.constant 0 : index
    %64 = vector.load %arg3[%c0_63, %c0_64] : memref<1x32xf32, #tpu.memory_space<vmem>>, vector<1x32xf32>
    %65 = vector.broadcast %64 : vector<1x32xf32> to vector<64x32xf32>
    %66 = arith.addf %63, %65 : vector<64x32xf32>
    %cst_65 = arith.constant 0.000000e+00 : f32
    %67 = vector.broadcast %cst_65 : f32 to vector<64x32xf32>
    %68 = arith.maximumf %66, %67 : vector<64x32xf32>
    %69 = arith.truncf %68 : vector<64x32xf32> to vector<64x32xbf16>
    %c0_66 = arith.constant 0 : index
    %c0_67 = arith.constant 0 : index
    %70 = vector.load %arg4[%c0_66, %c0_67] : memref<32x128xbf16, #tpu.memory_space<vmem>>, vector<32x128xbf16>
    %cst_68 = arith.constant dense<0.000000e+00> : vector<64x128xf32>
    %71 = tpu.matmul %69, %70, %cst_68 {dimension_numbers = #tpu.dot_dimension_numbers<[1], [0], [0], [1], [0, 0, 1, 1], [], []>} : vector<64x32xbf16>, vector<32x128xbf16>, vector<64x128xf32> -> vector<64x128xf32>
    %c0_69 = arith.constant 0 : index
    %c0_70 = arith.constant 0 : index
    %72 = vector.load %arg5[%c0_69, %c0_70] : memref<1x128xf32, #tpu.memory_space<vmem>>, vector<1x128xf32>
    %73 = vector.broadcast %72 : vector<1x128xf32> to vector<64x128xf32>
    %74 = arith.addf %71, %73 : vector<64x128xf32>
    %75 = vector.shape_cast %74 : vector<64x128xf32> to vector<1x64x128xf32>
    %c0_71 = arith.constant 0 : index
    %c0_72 = arith.constant 0 : index
    %c0_73 = arith.constant 0 : index
    %76 = vector.load %arg6[%c0_71, %c0_72, %c0_73] : memref<1x64x128xf32, #tpu.memory_space<vmem>>, vector<1x64x128xf32>
    tpu.vector_store %arg6[%c0_71, %c0_72, %c0_73], %75 {strides = array<i32>} : memref<1x64x128xf32, #tpu.memory_space<vmem>>, vector<1x64x128xf32>,
    return
  }
  func.func @transform_0(%arg0: i32) -> (i32, i32, i32, i32) {
    %c0_i32 = arith.constant 0 : i32
    %c0_i32_0 = arith.constant 0 : i32
    %c0_i32_1 = arith.constant 0 : i32
    %c0_i32_2 = arith.constant 0 : i32
    return %arg0, %c0_i32, %c0_i32_0, %c0_i32_1 : i32, i32, i32, i32
  }
  func.func @transform_1(%arg0: i32) -> (i32, i32, i32) {
    %c0_i32 = arith.constant 0 : i32
    %c0_i32_0 = arith.constant 0 : i32
    %c0_i32_1 = arith.constant 0 : i32
    %c0_i32_2 = arith.constant 0 : i32
    return %c0_i32, %c0_i32_0, %c0_i32_1 : i32, i32, i32
  }
  func.func @transform_2(%arg0: i32) -> (i32, i32) {
    %c0_i32 = arith.constant 0 : i32
    %c0_i32_0 = arith.constant 0 : i32
    %c0_i32_1 = arith.constant 0 : i32
    return %c0_i32, %c0_i32_0 : i32, i32
  }
  func.func @transform_3(%arg0: i32) -> (i32, i32) {
    %c0_i32 = arith.constant 0 : i32
    %c0_i32_0 = arith.constant 0 : i32
    %c0_i32_1 = arith.constant 0 : i32
    return %c0_i32, %c0_i32_0 : i32, i32
  }
  func.func @transform_4(%arg0: i32) -> (i32, i32) {
    %c0_i32 = arith.constant 0 : i32
    %c0_i32_0 = arith.constant 0 : i32
    %c0_i32_1 = arith.constant 0 : i32
    return %c0_i32, %c0_i32_0 : i32, i32
  }
  func.func @transform_5(%arg0: i32) -> (i32, i32, i32) {
    %c0_i32 = arith.constant 0 : i32
    %c0_i32_0 = arith.constant 0 : i32
    %c0_i32_1 = arith.constant 0 : i32
    return %arg0, %c0_i32, %c0_i32_0 : i32, i32, i32
  }
}

module attributes {stable_mosaic.version = 11 : i64} {
  func.func @_roi_head_kernel(%arg0: memref<2x32xf32, #tpu.memory_space<vmem>>, %arg1: memref<32x64xbf16, #tpu.memory_space<vmem>>, %arg2: memref<1x64xf32, #tpu.memory_space<vmem>>, %arg3: memref<64x128xbf16, #tpu.memory_space<vmem>>, %arg4: memref<1x128xf32, #tpu.memory_space<vmem>>, %arg5: memref<2x128xf32, #tpu.memory_space<vmem>>) attributes {dimension_semantics = [], scalar_prefetch = 0 : i64, scratch_operands = 0 : i64, tpu.core_type = #tpu.core_type<tc>} {
    %c0 = arith.constant 0 : index
    %c0_0 = arith.constant 0 : index
    %0 = vector.load %arg0[%c0, %c0_0] : memref<2x32xf32, #tpu.memory_space<vmem>>, vector<2x32xf32>
    %1 = arith.truncf %0 : vector<2x32xf32> to vector<2x32xbf16>
    %c0_1 = arith.constant 0 : index
    %c0_2 = arith.constant 0 : index
    %2 = vector.load %arg1[%c0_1, %c0_2] : memref<32x64xbf16, #tpu.memory_space<vmem>>, vector<32x64xbf16>
    %cst = arith.constant dense<0.000000e+00> : vector<2x64xf32>
    %3 = tpu.matmul %1, %2, %cst {dimension_numbers = #tpu.dot_dimension_numbers<[1], [0], [0], [1], [0, 0, 1, 1], [], []>} : vector<2x32xbf16>, vector<32x64xbf16>, vector<2x64xf32> -> vector<2x64xf32>
    %c0_3 = arith.constant 0 : index
    %c0_4 = arith.constant 0 : index
    %4 = vector.load %arg2[%c0_3, %c0_4] : memref<1x64xf32, #tpu.memory_space<vmem>>, vector<1x64xf32>
    %5 = vector.broadcast %4 : vector<1x64xf32> to vector<2x64xf32>
    %6 = arith.addf %3, %5 : vector<2x64xf32>
    %cst_5 = arith.constant 0.000000e+00 : f32
    %7 = vector.broadcast %cst_5 : f32 to vector<2x64xf32>
    %8 = arith.maximumf %6, %7 : vector<2x64xf32>
    %9 = arith.truncf %8 : vector<2x64xf32> to vector<2x64xbf16>
    %c0_6 = arith.constant 0 : index
    %c0_7 = arith.constant 0 : index
    %10 = vector.load %arg3[%c0_6, %c0_7] : memref<64x128xbf16, #tpu.memory_space<vmem>>, vector<64x128xbf16>
    %cst_8 = arith.constant dense<0.000000e+00> : vector<2x128xf32>
    %11 = tpu.matmul %9, %10, %cst_8 {dimension_numbers = #tpu.dot_dimension_numbers<[1], [0], [0], [1], [0, 0, 1, 1], [], []>} : vector<2x64xbf16>, vector<64x128xbf16>, vector<2x128xf32> -> vector<2x128xf32>
    %c0_9 = arith.constant 0 : index
    %c0_10 = arith.constant 0 : index
    %12 = vector.load %arg4[%c0_9, %c0_10] : memref<1x128xf32, #tpu.memory_space<vmem>>, vector<1x128xf32>
    %13 = vector.broadcast %12 : vector<1x128xf32> to vector<2x128xf32>
    %14 = arith.addf %11, %13 : vector<2x128xf32>
    %c0_11 = arith.constant 0 : index
    %c0_12 = arith.constant 0 : index
    %15 = vector.load %arg5[%c0_11, %c0_12] : memref<2x128xf32, #tpu.memory_space<vmem>>, vector<2x128xf32>
    tpu.vector_store %arg5[%c0_11, %c0_12], %14 {strides = array<i32>} : memref<2x128xf32, #tpu.memory_space<vmem>>, vector<2x128xf32>,
    return
  }
}

</mosaic_0001>

<llo_original>
// kernel: detection_and_segmentation_forward.3
$region0: #{detection_and_segmentation_forward.3}
  #allocation0 [shape = 'u32[]', space=smem, size = 0x4, offset = 0x4, fixed_abs, tag = 'smem constant byte address 0x4 - core index']
  #allocation1 [shape = 'u32[72,128]{1,0:T(1,128)}', space=vmem, size = 0x9000, scoped, tag = 'internal scratch']
  %s0 = inlined_call_operand.vmem [shape: bf16[2,64,27], index: 0, kind: input, shape index: {}]
  %s1 = inlined_call_operand.vmem [shape: bf16[27,32], index: 1, kind: input, shape index: {}]
  %s2 = inlined_call_operand.vmem [shape: f32[1,32], index: 2, kind: input, shape index: {}]
  %s3 = inlined_call_operand.vmem [shape: bf16[32,8], index: 3, kind: input, shape index: {}]
  %s4 = inlined_call_operand.vmem [shape: f32[1,8], index: 4, kind: input, shape index: {}]
  %s5 = inlined_call_operand.vmem [shape: bf16[2,64,32], index: 5, kind: output, shape index: {0}]
  %s6 = inlined_call_operand.vmem [shape: f32[2,64,8], index: 6, kind: output, shape index: {1}]
  %s7 = inlined_call_operand.vmem [shape: f32[2,8,32], index: 7, kind: output, shape index: {2}]
  %8 = xla_tuple %s5, %s6, %s7
  %s9 = sld [smem:[#allocation0]]
  $region73: #{detection_and_segmentation_forward.3} parent=0
    _
  %s11 = ssub.s32 1, %s9
  %s12 = scalar_select 0, %s11, %s9
  loop: start=0, step=1, limit=4
  $region2: #{detection_and_segmentation_forward.3} parent=0 // loop_pre_header
    _
  $region3: #{detection_and_segmentation_forward.3} parent=0 // loop_header
    %s14 = sphi 0, %s18
    %p15 = scmp.ge.s32.totalorder %s14, 4
    %s21 = sphi 0, %s33
    %s22 = sphi 0, %s29
    %s23 = sphi 0, %s21
    %s24 = sphi 0, %s22
    %s25 = sphi 0, %s23
    %s26 = sphi 0, %s24
    %s38 = sphi 0, %s40
    %s41 = sphi 0, %s38
    %s42 = sphi 0, %s41
    %s58 = sphi 0, %s42
    %s62 = sphi 0, %s62
    %s64 = sphi 0, %s62
    %s65 = sphi 0, %s64
    %s79 = sphi 0, %s65
    %s83 = sphi 0, %s83
    %s85 = sphi 0, %s83
    %s86 = sphi 0, %s85
    %s100 = sphi 0, %s86
    %s104 = sphi 0, %s104
    %s106 = sphi 0, %s104
    %s107 = sphi 0, %s106
    %s121 = sphi 0, %s107
    %s125 = sphi 0, %s125
    %s127 = sphi 0, %s125
    %s128 = sphi 0, %s127
    %s142 = sphi 0, %s128
    %s150 = sphi 0, %s152
    %s153 = sphi 0, %s150
    %s154 = sphi 0, %s153
    %s170 = sphi 0, %s154
    %s178 = sphi 0, %s180
    %s181 = sphi 0, %s178
    %s182 = sphi 0, %s181
    %s198 = sphi 0, %s182
    %s204 = sphi 0, %s206
    %s207 = sphi 0, %s204
    %s208 = sphi 0, %s207
    %s224 = sphi 0, %s208
  $region4: #{detection_and_segmentation_forward.3} parent=0 // loop_header_branch
    %17 = sbr.rel (%p15) target = $region8
  $region5: #{detection_and_segmentation_forward.3} parent=0 // loop_body
    %s19 = ssub.s32 %s14, 1
    %s20 = ssub.s32 %s14, 2
    %s27 = sadd.s32 1, %s22
    %p28 = scmp.ge.s32.totalorder %s27, 1
    %s29 = scalar_select %p28, 0, %s27
    %s30 = sadd.s32 1, %s21
    %s31 = scalar_select %p28, %s30, %s21
    %p32 = scmp.ge.s32.totalorder %s31, 2
    %s33 = scalar_select %p32, 0, %s31
    %s34 = ssub.s32 %s21, %s33
    %s35 = ssub.s32 %s22, %s29
    %s36 = sor.u32 %s34, %s35
    %p37 = scmp.eq.s32.totalorder %s36, 0
    %s39 = sadd.s32 %s38, 1
    %s40 = scalar_select %p37, %s38, %s39
    %p43 = pneg %p37
    %p44 = scmp.eq.s32.totalorder %s14, 1
    %p45 = por %p43, %p44
    %p46 = scmp.ne.s32.totalorder %s38, %s41
    %p47 = scmp.eq.s32.totalorder %s14, 0
    %p48 = por %p46, %p47
    %p49 = scmp.ne.s32.totalorder %s38, %s41
    %p50 = scmp.eq.s32.totalorder %s19, 1
    %p51 = por %p49, %p50
    %p52 = scmp.ne.s32.totalorder %s41, %s42
    %p53 = scmp.eq.s32.totalorder %s19, 0
    %p54 = por %p52, %p53
    %p55 = scmp.ne.s32.totalorder %s41, %s42
    %p56 = scmp.eq.s32.totalorder %s20, 1
    %p57 = por %p55, %p56
    %p59 = scmp.ne.s32.totalorder %s42, %s58
    %p60 = scmp.eq.s32.totalorder %s20, 0
    %p61 = por %p59, %p60
    %s63 = sadd.s32 %s62, 1
    %p66 = scmp.eq.s32.totalorder %s14, 1
    %p67 = scmp.ne.s32.totalorder %s62, %s64
    %p68 = scmp.eq.s32.totalorder %s14, 0
    %p69 = por %p67, %p68
    %p70 = scmp.ne.s32.totalorder %s62, %s64
    %p71 = scmp.eq.s32.totalorder %s19, 1
    %p72 = por %p70, %p71
    %p73 = scmp.ne.s32.totalorder %s64, %s65
    %p74 = scmp.eq.s32.totalorder %s19, 0
    %p75 = por %p73, %p74
    %p76 = scmp.ne.s32.totalorder %s64, %s65
    %p77 = scmp.eq.s32.totalorder %s20, 1
    %p78 = por %p76, %p77
    %p80 = scmp.ne.s32.totalorder %s65, %s79
    %p81 = scmp.eq.s32.totalorder %s20, 0
    %p82 = por %p80, %p81
    %s84 = sadd.s32 %s83, 1
    %p87 = scmp.eq.s32.totalorder %s14, 1
    %p88 = scmp.ne.s32.totalorder %s83, %s85
    %p89 = scmp.eq.s32.totalorder %s14, 0
    %p90 = por %p88, %p89
    %p91 = scmp.ne.s32.totalorder %s83, %s85
    %p92 = scmp.eq.s32.totalorder %s19, 1
    %p93 = por %p91, %p92
    %p94 = scmp.ne.s32.totalorder %s85, %s86
    %p95 = scmp.eq.s32.totalorder %s19, 0
    %p96 = por %p94, %p95
    %p97 = scmp.ne.s32.totalorder %s85, %s86
    %p98 = scmp.eq.s32.totalorder %s20, 1
    %p99 = por %p97, %p98
    %p101 = scmp.ne.s32.totalorder %s86, %s100
    %p102 = scmp.eq.s32.totalorder %s20, 0
    %p103 = por %p101, %p102
    %s105 = sadd.s32 %s104, 1
    %p108 = scmp.eq.s32.totalorder %s14, 1
    %p109 = scmp.ne.s32.totalorder %s104, %s106
    %p110 = scmp.eq.s32.totalorder %s14, 0
    %p111 = por %p109, %p110
    %p112 = scmp.ne.s32.totalorder %s104, %s106
    %p113 = scmp.eq.s32.totalorder %s19, 1
    %p114 = por %p112, %p113
    %p115 = scmp.ne.s32.totalorder %s106, %s107
    %p116 = scmp.eq.s32.totalorder %s19, 0
    %p117 = por %p115, %p116
    %p118 = scmp.ne.s32.totalorder %s106, %s107
    %p119 = scmp.eq.s32.totalorder %s20, 1
    %p120 = por %p118, %p119
    %p122 = scmp.ne.s32.totalorder %s107, %s121
    %p123 = scmp.eq.s32.totalorder %s20, 0
    %p124 = por %p122, %p123
    %s126 = sadd.s32 %s125, 1
    %p129 = scmp.eq.s32.totalorder %s14, 1
    %p130 = scmp.ne.s32.totalorder %s125, %s127
    %p131 = scmp.eq.s32.totalorder %s14, 0
    %p132 = por %p130, %p131
    %p133 = scmp.ne.s32.totalorder %s125, %s127
    %p134 = scmp.eq.s32.totalorder %s19, 1
    %p135 = por %p133, %p134
    %p136 = scmp.ne.s32.totalorder %s127, %s128
    %p137 = scmp.eq.s32.totalorder %s19, 0
    %p138 = por %p136, %p137
    %p139 = scmp.ne.s32.totalorder %s127, %s128
    %p140 = scmp.eq.s32.totalorder %s20, 1
    %p141 = por %p139, %p140
    %p143 = scmp.ne.s32.totalorder %s128, %s142
    %p144 = scmp.eq.s32.totalorder %s20, 0
    %p145 = por %p143, %p144
    %s146 = ssub.s32 %s21, %s33
    %s147 = ssub.s32 %s22, %s29
    %s148 = sor.u32 %s146, %s147
    %p149 = scmp.eq.s32.totalorder %s148, 0
    %s151 = sadd.s32 %s150, 1
    %s152 = scalar_select %p149, %s150, %s151
    %p155 = pneg %p149
    %p156 = scmp.eq.s32.totalorder %s14, 1
    %p157 = por %p155, %p156
    %p158 = scmp.ne.s32.totalorder %s150, %s153
    %p159 = scmp.eq.s32.totalorder %s14, 0
    %p160 = por %p158, %p159
    %p161 = scmp.ne.s32.totalorder %s150, %s153
    %p162 = scmp.eq.s32.totalorder %s19, 1
    %p163 = por %p161, %p162
    %p164 = scmp.ne.s32.totalorder %s153, %s154
    %p165 = scmp.eq.s32.totalorder %s19, 0
    %p166 = por %p164, %p165
    %p167 = scmp.ne.s32.totalorder %s153, %s154
    %p168 = scmp.eq.s32.totalorder %s20, 1
    %p169 = por %p167, %p168
    %p171 = scmp.ne.s32.totalorder %s154, %s170
    %p172 = scmp.eq.s32.totalorder %s20, 0
    %p173 = por %p171, %p172
    %s174 = ssub.s32 %s21, %s33
    %s175 = ssub.s32 %s22, %s29
    %s176 = sor.u32 %s174, %s175
    %p177 = scmp.eq.s32.totalorder %s176, 0
    %s179 = sadd.s32 %s178, 1
    %s180 = scalar_select %p177, %s178, %s179
    %p183 = pneg %p177
    %p184 = scmp.eq.s32.totalorder %s14, 1
    %p185 = por %p183, %p184
    %p186 = scmp.ne.s32.totalorder %s178, %s181
    %p187 = scmp.eq.s32.totalorder %s14, 0
    %p188 = por %p186, %p187
    %p189 = scmp.ne.s32.totalorder %s178, %s181
    %p190 = scmp.eq.s32.totalorder %s19, 1
    %p191 = por %p189, %p190
    %p192 = scmp.ne.s32.totalorder %s181, %s182
    %p193 = scmp.eq.s32.totalorder %s19, 0
    %p194 = por %p192, %p193
    %p195 = scmp.ne.s32.totalorder %s181, %s182
    %p196 = scmp.eq.s32.totalorder %s20, 1
    %p197 = por %p195, %p196
    %p199 = scmp.ne.s32.totalorder %s182, %s198
    %p200 = scmp.eq.s32.totalorder %s20, 0
    %p201 = por %p199, %p200
    %s202 = ssub.s32 %s21, %s33
    %p203 = scmp.eq.s32.totalorder %s202, 0
    %s205 = sadd.s32 %s204, 1
    %s206 = scalar_select %p203, %s204, %s205
    %p209 = pneg %p203
    %p210 = scmp.eq.s32.totalorder %s14, 1
    %p211 = por %p209, %p210
    %p212 = scmp.ne.s32.totalorder %s204, %s207
    %p213 = scmp.eq.s32.totalorder %s14, 0
    %p214 = por %p212, %p213
    %p215 = scmp.ne.s32.totalorder %s204, %s207
    %p216 = scmp.eq.s32.totalorder %s19, 1
    %p217 = por %p215, %p216
    %p218 = scmp.ne.s32.totalorder %s207, %s208
    %p219 = scmp.eq.s32.totalorder %s19, 0
    %p220 = por %p218, %p219
    %p221 = scmp.ne.s32.totalorder %s207, %s208
    %p222 = scmp.eq.s32.totalorder %s20, 1
    %p223 = por %p221, %p222
    %p225 = scmp.ne.s32.totalorder %s208, %s224
    %p226 = scmp.eq.s32.totalorder %s20, 0
    %p227 = por %p225, %p226
    %p228 = scmp.le.s32.totalorder 1, %s14
    %p229 = scmp.lt.s32.totalorder %s14, 3
    %p230 = pnand %p228, %p229
    %p231 = pneg %p230
    // Predicated region
    $region9: #{detection_and_segmentation_forward.3} parent=5 // pred_check
      _
    $region10: #{detection_and_segmentation_forward.3} parent=5 // pred_check_branch
      %233 = sbr.rel (%p230) target = $region12
    $region11: #{detection_and_segmentation_forward.3} parent=5 // pred_region
      %s234 = ssub.s32 %s14, 1
      // Predicated region
      $region13: #{detection_and_segmentation_forward.3} parent=11 // pred_check
        %p235 = pneg %p75
      $region14: #{detection_and_segmentation_forward.3} parent=11 // pred_check_branch
        %237 = sbr.rel (%p235) target = $region16
      $region15: #{detection_and_segmentation_forward.3} parent=11 // pred_region
        _
      $region16: #{detection_and_segmentation_forward.3} parent=11 // pred_fallthru
        _
      // Predicated region
      $region17: #{detection_and_segmentation_forward.3} parent=11 // pred_check
        %p238 = pneg %p96
      $region18: #{detection_and_segmentation_forward.3} parent=11 // pred_check_branch
        %240 = sbr.rel (%p238) target = $region20
      $region19: #{detection_and_segmentation_forward.3} parent=11 // pred_region
        _
      $region20: #{detection_and_segmentation_forward.3} parent=11 // pred_fallthru
        _
      // Predicated region
      $region21: #{detection_and_segmentation_forward.3} parent=11 // pred_check
        %p241 = pneg %p117
      $region22: #{detection_and_segmentation_forward.3} parent=11 // pred_check_branch
        %243 = sbr.rel (%p241) target = $region24
      $region23: #{detection_and_segmentation_forward.3} parent=11 // pred_region
        _
      $region24: #{detection_and_segmentation_forward.3} parent=11 // pred_fallthru
        _
      // Predicated region
      $region25: #{detection_and_segmentation_forward.3} parent=11 // pred_check
        %p244 = pneg %p138
      $region26: #{detection_and_segmentation_forward.3} parent=11 // pred_check_branch
        %246 = sbr.rel (%p244) target = $region28
      $region27: #{detection_and_segmentation_forward.3} parent=11 // pred_region
        _
      $region28: #{detection_and_segmentation_forward.3} parent=11 // pred_fallthru
        _
    $region12: #{detection_and_segmentation_forward.3} parent=5 // pred_fallthru
      _
    %p247 = scmp.lt.s32.totalorder %s14, 2
    // Predicated region
    $region29: #{detection_and_segmentation_forward.3} parent=5 // pred_check
      %p248 = pneg %p247
    $region30: #{detection_and_segmentation_forward.3} parent=5 // pred_check_branch
      %250 = sbr.rel (%p248) target = $region32
    $region31: #{detection_and_segmentation_forward.3} parent=5 // pred_region
      // Predicated region
      $region33: #{detection_and_segmentation_forward.3} parent=31 // pred_check
        %p251 = pneg %p48
      $region34: #{detection_and_segmentation_forward.3} parent=31 // pred_check_branch
        %253 = sbr.rel (%p251) target = $region36
      $region35: #{detection_and_segmentation_forward.3} parent=31 // pred_region
        %s254 = smul.u32 8, %s22
        %p255 = scmp.lt.s32.totalorder %s21, 1
        %s256 = scalar_select %p255, %s21, 1
        %p257 = scmp.lt.s32.totalorder %s254, 7
        %s258 = scalar_select %p257, %s254, 7
        %s259 = smul.addr %s256, 8
        %s260 = sadd.s32 %s258, %s259
        %s261 = smul.addr %s260, 4
        %s262 = scalar_lea.vmem %s0, %s261
        %s263 = smul.u32 8, %s22
      $region36: #{detection_and_segmentation_forward.3} parent=31 // pred_fallthru
        _
    $region32: #{detection_and_segmentation_forward.3} parent=5 // pred_fallthru
      _
    %p264 = scmp.le.s32.totalorder 1, %s14
    %p265 = scmp.lt.s32.totalorder %s14, 3
    %p266 = pnand %p264, %p265
    %p267 = pneg %p266
    // Predicated region
    $region37: #{detection_and_segmentation_forward.3} parent=5 // pred_check
      _
    $region38: #{detection_and_segmentation_forward.3} parent=5 // pred_check_branch
      %269 = sbr.rel (%p266) target = $region40
    $region39: #{detection_and_segmentation_forward.3} parent=5 // pred_region
      %s270 = ssub.s32 %s14, 1
      %s271 = smul.u32 8, %s24
      %p272 = scmp.lt.s32.totalorder %s23, 1
      %s273 = scalar_select %p272, %s23, 1
      %p274 = scmp.lt.s32.totalorder %s271, 7
      %s275 = scalar_select %p274, %s271, 7
      %s276 = smul.addr %s273, 8
      %s277 = sadd.s32 %s275, %s276
      %s278 = smul.addr %s277, 4
      %s279 = scalar_lea.vmem %s0, %s278
      %p280 = pneg %p54
      %p281 = pneg %p51
      %p282 = pneg %p75
      %p283 = pneg %p72
      %p284 = pneg %p96
      %p285 = pneg %p93
      %p286 = pneg %p117
      %p287 = pneg %p114
      %p288 = pneg %p138
      %p289 = pneg %p135
      %p290 = pneg %p166
      %p291 = pneg %p163
      %s292 = smul.u32 8, %s24
      %p293 = scmp.lt.s32.totalorder %s23, 1
      %s294 = scalar_select %p293, %s23, 1
      %p295 = scmp.lt.s32.totalorder %s292, 7
      %s296 = scalar_select %p295, %s292, 7
      %s297 = smul.addr %s294, 8
      %s298 = sadd.s32 %s296, %s297
      %s299 = smul.addr %s298, 4
      %s300 = scalar_lea.vmem %s5, %s299
      %p301 = pneg %p194
      %p302 = pneg %p191
      %s303 = smul.u32 8, %s24
      %p304 = scmp.lt.s32.totalorder %s23, 1
      %s305 = scalar_select %p304, %s23, 1
      %p306 = scmp.lt.s32.totalorder %s303, 7
      %s307 = scalar_select %p306, %s303, 7
      %s308 = smul.addr %s305, 8
      %s309 = sadd.s32 %s307, %s308
      %s310 = smul.addr %s309, 8
      %s311 = scalar_lea.vmem %s6, %s310
      %p312 = pneg %p220
      %p313 = pneg %p217
      %p314 = scmp.lt.s32.totalorder %s23, 1
      %s315 = scalar_select %p314, %s23, 1
      %s316 = smul.addr %s315, 8
      %s317 = scalar_lea.vmem %s7, %s316
      %s318 = smul.u32 8, %s24
      %p319 = scmp.lt.s32.totalorder %s23, 1
      %s320 = scalar_select %p319, %s23, 1
      %p321 = scmp.lt.s32.totalorder %s318, 7
      %s322 = scalar_select %p321, %s318, 7
      %s323 = smul.addr %s320, 8
      %s324 = sadd.s32 %s322, %s323
      %s325 = smul.addr %s324, 4
      %s326 = scalar_lea.vmem %s0, %s325
      %s327 = smul.u32 8, %s24
      %s328 = smul.u32 8, %s24
      %p329 = scmp.lt.s32.totalorder %s23, 1
      %s330 = scalar_select %p329, %s23, 1
      %p331 = scmp.lt.s32.totalorder %s328, 7
      %s332 = scalar_select %p331, %s328, 7
      %s333 = smul.addr %s330, 8
      %s334 = sadd.s32 %s332, %s333
      %s335 = smul.addr %s334, 4
      %s336 = scalar_lea.vmem %s5, %s335
      %s337 = smul.u32 8, %s24
      %s338 = smul.u32 8, %s24
      %p339 = scmp.lt.s32.totalorder %s23, 1
      %s340 = scalar_select %p339, %s23, 1
      %p341 = scmp.lt.s32.totalorder %s338, 7
      %s342 = scalar_select %p341, %s338, 7
      %s343 = smul.addr %s340, 8
      %s344 = sadd.s32 %s342, %s343
      %s345 = smul.addr %s344, 8
      %s346 = scalar_lea.vmem %s6, %s345
      %s347 = smul.u32 8, %s24
      %p348 = scmp.lt.s32.totalorder %s23, 1
      %s349 = scalar_select %p348, %s23, 1
      %s350 = smul.addr %s349, 8
      %s351 = scalar_lea.vmem %s7, %s350
      %v353 = vld [vmem:[%s326] sm:$0xf]
      %v354 = vld [vmem:[%s326 + $0x4] sm:$0xf]
      %v355 = vld [vmem:[%s326 + $0x8] sm:$0xf]
      %v356 = vld [vmem:[%s326 + $0xc] sm:$0xf]
      %v357 = vld [vmem:[%s326 + $0x10] sm:$0xf]
      %v358 = vld [vmem:[%s326 + $0x14] sm:$0xf]
      %v359 = vld [vmem:[%s326 + $0x18] sm:$0xf]
      %v360 = vld [vmem:[%s326 + $0x1c] sm:$0xf]
      %v361 = vld [vmem:[%s1] sm:$0xf]
      %v362 = vld [vmem:[%s1 + $0x4] sm:$0xf]
      %v363 = vld [vmem:[%s1 + $0x8] sm:$0xf]
      %v364 = vld [vmem:[%s1 + $0xc] sm:$0x3]
      %v365 = vld [vmem:[%s2] sm:$0x1]
      %v367 = vperm.slane %v365, 0
      %v377 = vunpack.c.l.b16 %v353
      %v378 = vunpack.c.l.b16 %v354
      %v379 = vunpack.c.l.b16 %v355
      %v380 = vunpack.c.l.b16 %v356
      %v381 = vunpack.c.l.b16 %v357
      %v382 = vunpack.c.l.b16 %v358
      %v383 = vunpack.c.l.b16 %v359
      %v384 = vunpack.c.l.b16 %v360
      %v385 = vpack.c.b16 %v378, %v377
      %v386 = vpack.c.b16 %v380, %v379
      %v387 = vpack.c.b16 %v382, %v381
      %v388 = vpack.c.b16 %v384, %v383
      %v393 = vunpack.c.l.b16 %v361
      %v394 = vunpack.c.l.b16 %v362
      %v395 = vunpack.c.l.b16 %v363
      %v396 = vunpack.c.l.b16 %v364
      %v397 = vpack.c.b16 %v394, %v393
      %v398 = vpack.c.b16 %v396, %v395
      %vm400 = vcmask 220160
      %v402 = vsel %vm400, %v385, 0
      %v405 = vsel %vm400, %v386, 0
      %v408 = vsel %vm400, %v387, 0
      %v411 = vsel %vm400, %v388, 0
      %vm413 = vcmask 1044480
      %vm414 = vcmask 1045504
      %v415 = vsel %vm413, 4294967295, 65535
      %v416 = vsel %vm414, %v415, 0
      %v418 = vand.u32 %v398, %v416
      %420 = vmatpush.bf16.msra.mxu0 0
      %421 = vmatpush.bf16.msra.mxu0 0
      %422 = vmatpush.bf16.msra.mxu0 0
      %423 = vmatpush.bf16.msra.mxu0 0
      %424 = vmatpush.bf16.msra.mxu0 0
      %425 = vmatpush.bf16.msra.mxu0 0
      %426 = vmatpush.bf16.msra.mxu0 %v418
      %427 = vmatpush.bf16.msra.mxu0 %v397
      %428 = vmatmul.bf16.gmra.mxu0 %v402
      %v429 = vpop.f32.mrf.mxu0
      %v430 = vadd.f32 %v367, %v429
      %v431 = vpop.f32.mrf.mxu0
      %v432 = vadd.f32 %v367, %v431
      %433 = vmatmul.bf16.gmra.mxu0 %v405
      %v434 = vpop.f32.mrf.mxu0
      %v435 = vadd.f32 %v367, %v434
      %v436 = vpop.f32.mrf.mxu0
      %v437 = vadd.f32 %v367, %v436
      %438 = vmatmul.bf16.gmra.mxu0 %v408
      %v439 = vpop.f32.mrf.mxu0
      %v440 = vadd.f32 %v367, %v439
      %v441 = vpop.f32.mrf.mxu0
      %v442 = vadd.f32 %v367, %v441
      %443 = vmatmul.bf16.gmra.mxu0 %v411
      %v444 = vpop.f32.mrf.mxu0
      %v445 = vadd.f32 %v367, %v444
      %v446 = vpop.f32.mrf.mxu0
      %v447 = vadd.f32 %v367, %v446
      %448 = vdwg.mxu0
      %v449 = vmax.f32 %v430, 0.0
      %v450 = vmax.f32 %v432, 0.0
      %v451 = vmax.f32 %v435, 0.0
      %v452 = vmax.f32 %v437, 0.0
      %v453 = vmax.f32 %v440, 0.0
      %v454 = vmax.f32 %v442, 0.0
      %v455 = vmax.f32 %v445, 0.0
      %v456 = vmax.f32 %v447, 0.0
      %v457 = vpack.c.bf16 %v449, %v449
      %v458 = vpack.c.bf16 %v450, %v450
      %v459 = vpack.c.bf16 %v451, %v451
      %v460 = vpack.c.bf16 %v452, %v452
      %v461 = vpack.c.bf16 %v453, %v453
      %v462 = vpack.c.bf16 %v454, %v454
      %v463 = vpack.c.bf16 %v455, %v455
      %v464 = vpack.c.bf16 %v456, %v456
      %vm465 = vcmask 257024
      %466 = vst.msk [vmem:[%s336] sm:$0xf] %vm465, %v457
      %467 = vst.msk [vmem:[%s336 + $0x4] sm:$0xf] %vm465, %v458
      %468 = vst.msk [vmem:[%s336 + $0x8] sm:$0xf] %vm465, %v459
      %469 = vst.msk [vmem:[%s336 + $0xc] sm:$0xf] %vm465, %v460
      %470 = vst.msk [vmem:[%s336 + $0x10] sm:$0xf] %vm465, %v461
      %471 = vst.msk [vmem:[%s336 + $0x14] sm:$0xf] %vm465, %v462
      %472 = vst.msk [vmem:[%s336 + $0x18] sm:$0xf] %vm465, %v463
      %473 = vst.msk [vmem:[%s336 + $0x1c] sm:$0xf] %vm465, %v464
      %v474 = vld [vmem:[%s3] sm:$0xf]
      %v475 = vld [vmem:[%s3 + $0x4] sm:$0xf]
      %v476 = vld [vmem:[%s3 + $0x8] sm:$0xf]
      %v477 = vld [vmem:[%s3 + $0xc] sm:$0xf]
      %v478 = vld [vmem:[%s4] sm:$0x1]
      %v480 = vperm.slane %v478, 0
      %v490 = vunpack.c.l.b16 %v457
      %v491 = vunpack.c.l.b16 %v458
      %v492 = vunpack.c.l.b16 %v459
      %v493 = vunpack.c.l.b16 %v460
      %v494 = vunpack.c.l.b16 %v461
      %v495 = vunpack.c.l.b16 %v462
      %v496 = vunpack.c.l.b16 %v463
      %v497 = vunpack.c.l.b16 %v464
      %v498 = vpack.c.b16 %v491, %v490
      %v499 = vpack.c.b16 %v493, %v492
      %v500 = vpack.c.b16 %v495, %v494
      %v501 = vpack.c.b16 %v497, %v496
      %v506 = vunpack.c.l.b16 %v474
      %v507 = vunpack.c.l.b16 %v475
      %v508 = vunpack.c.l.b16 %v476
      %v509 = vunpack.c.l.b16 %v477
      %v510 = vpack.c.b16 %v507, %v506
      %v511 = vpack.c.b16 %v509, %v508
      %vm514 = vcmask 261120
      %v516 = vsel %vm514, %v498, 0
      %v519 = vsel %vm514, %v499, 0
      %v522 = vsel %vm514, %v500, 0
      %v525 = vsel %vm514, %v501, 0
      %527 = vmatpush.bf16.msra.mxu0 0
      %528 = vmatpush.bf16.msra.mxu0 0
      %529 = vmatpush.bf16.msra.mxu0 0
      %530 = vmatpush.bf16.msra.mxu0 0
      %531 = vmatpush.bf16.msra.mxu0 0
      %532 = vmatpush.bf16.msra.mxu0 0
      %533 = vmatpush.bf16.msra.mxu0 %v511
      %534 = vmatpush.bf16.msra.mxu0 %v510
      %535 = vmatmul.bf16.gmra.mxu0 %v516
      %v536 = vpop.f32.mrf.mxu0
      %v537 = vadd.f32 %v480, %v536
      %v538 = vpop.f32.mrf.mxu0
      %v539 = vadd.f32 %v480, %v538
      %540 = vmatmul.bf16.gmra.mxu0 %v519
      %v541 = vpop.f32.mrf.mxu0
      %v542 = vadd.f32 %v480, %v541
      %v543 = vpop.f32.mrf.mxu0
      %v544 = vadd.f32 %v480, %v543
      %545 = vmatmul.bf16.gmra.mxu0 %v522
      %v546 = vpop.f32.mrf.mxu0
      %v547 = vadd.f32 %v480, %v546
      %v548 = vpop.f32.mrf.mxu0
      %v549 = vadd.f32 %v480, %v548
      %550 = vmatmul.bf16.gmra.mxu0 %v525
      %v551 = vpop.f32.mrf.mxu0
      %v552 = vadd.f32 %v480, %v551
      %v553 = vpop.f32.mrf.mxu0
      %v554 = vadd.f32 %v480, %v553
      %555 = vdwg.mxu0
      %vm556 = vcmask 64512
      %557 = vst.msk [vmem:[%s346] sm:$0xff] %vm556, %v537
      %558 = vst.msk [vmem:[%s346 + $0x8] sm:$0xff] %vm556, %v539
      %559 = vst.msk [vmem:[%s346 + $0x10] sm:$0xff] %vm556, %v542
      %560 = vst.msk [vmem:[%s346 + $0x18] sm:$0xff] %vm556, %v544
      %561 = vst.msk [vmem:[%s346 + $0x20] sm:$0xff] %vm556, %v547
      %562 = vst.msk [vmem:[%s346 + $0x28] sm:$0xff] %vm556, %v549
      %563 = vst.msk [vmem:[%s346 + $0x30] sm:$0xff] %vm556, %v552
      %564 = vst.msk [vmem:[%s346 + $0x38] sm:$0xff] %vm556, %v554
      %p565 = scmp.eq.s32.totalorder %s24, 0
      // Predicated region
      $region41: #{detection_and_segmentation_forward.3} parent=39 // pred_check
        %p566 = pneg %p565
      $region42: #{detection_and_segmentation_forward.3} parent=39 // pred_check_branch
        %568 = sbr.rel (%p566) target = $region44
      $region43: #{detection_and_segmentation_forward.3} parent=39 // pred_region
        %569 = vst.msk [vmem:[%s351] sm:$0xff] %vm514, 0.0
      $region44: #{detection_and_segmentation_forward.3} parent=39 // pred_fallthru
        _
      %v570 = vsel %vm514, %v449, 0.0
      %v571 = vsel %vm514, %v450, 0.0
      %v572 = vadd.f32 %v570, %v571
      %v573 = vsel %vm514, %v451, 0.0
      %v574 = vadd.f32 %v572, %v573
      %v575 = vsel %vm514, %v452, 0.0
      %v576 = vadd.f32 %v574, %v575
      %v577 = vsel %vm514, %v453, 0.0
      %v578 = vadd.f32 %v576, %v577
      %v579 = vsel %vm514, %v454, 0.0
      %v580 = vadd.f32 %v578, %v579
      %v581 = vsel %vm514, %v455, 0.0
      %v582 = vadd.f32 %v580, %v581
      %v583 = vsel %vm514, %v456, 0.0
      %v584 = vadd.f32 %v582, %v583
      %v585 = vrot.slane %v584, 4
      %v586 = vadd.f32 %v584, %v585
      %v587 = vrot.slane %v586, 2
      %v588 = vadd.f32 %v586, %v587
      %v589 = vrot.slane %v588, 1
      %v590 = vadd.f32 %v588, %v589
      %v591 = vmul.f32 %v590, 0.015625
      %v592 = vld [vmem:[%s351] sm:$0xff]
      %v593 = vadd.f32 %v592, %v591
      %594 = vst.msk [vmem:[%s351] sm:$0xff] %vm514, %v593
      %s595 = smul.u32 8, %s24
      %p596 = scmp.lt.s32.totalorder %s23, 1
      %s597 = scalar_select %p596, %s23, 1
      %p598 = scmp.lt.s32.totalorder %s595, 7
      %s599 = scalar_select %p598, %s595, 7
      %s600 = smul.addr %s597, 8
      %s601 = sadd.s32 %s599, %s600
      %s602 = smul.addr %s601, 4
      %s603 = scalar_lea.vmem %s5, %s602
      %s604 = smul.u32 8, %s24
      %p605 = scmp.lt.s32.totalorder %s23, 1
      %s606 = scalar_select %p605, %s23, 1
      %p607 = scmp.lt.s32.totalorder %s604, 7
      %s608 = scalar_select %p607, %s604, 7
      %s609 = smul.addr %s606, 8
      %s610 = sadd.s32 %s608, %s609
      %s611 = smul.addr %s610, 8
      %s612 = scalar_lea.vmem %s6, %s611
      %p613 = scmp.lt.s32.totalorder %s23, 1
      %s614 = scalar_select %p613, %s23, 1
      %s615 = smul.addr %s614, 8
      %s616 = scalar_lea.vmem %s7, %s615
      // Predicated region
      $region45: #{detection_and_segmentation_forward.3} parent=39 // pred_check
        %p617 = pneg %p163
      $region46: #{detection_and_segmentation_forward.3} parent=39 // pred_check_branch
        %619 = sbr.rel (%p617) target = $region48
      $region47: #{detection_and_segmentation_forward.3} parent=39 // pred_region
        %s620 = smul.u32 8, %s24
      $region48: #{detection_and_segmentation_forward.3} parent=39 // pred_fallthru
        _
      // Predicated region
      $region49: #{detection_and_segmentation_forward.3} parent=39 // pred_check
        %p621 = pneg %p191
      $region50: #{detection_and_segmentation_forward.3} parent=39 // pred_check_branch
        %623 = sbr.rel (%p621) target = $region52
      $region51: #{detection_and_segmentation_forward.3} parent=39 // pred_region
        %s624 = smul.u32 8, %s24
      $region52: #{detection_and_segmentation_forward.3} parent=39 // pred_fallthru
        _
      // Predicated region
      $region53: #{detection_and_segmentation_forward.3} parent=39 // pred_check
        %p625 = pneg %p217
      $region54: #{detection_and_segmentation_forward.3} parent=39 // pred_check_branch
        %627 = sbr.rel (%p625) target = $region56
      $region55: #{detection_and_segmentation_forward.3} parent=39 // pred_region
        _
      $region56: #{detection_and_segmentation_forward.3} parent=39 // pred_fallthru
        _
    $region40: #{detection_and_segmentation_forward.3} parent=5 // pred_fallthru
      _
    %p628 = scmp.le.s32.totalorder 2, %s14
    // Predicated region
    $region57: #{detection_and_segmentation_forward.3} parent=5 // pred_check
      %p629 = pneg %p628
    $region58: #{detection_and_segmentation_forward.3} parent=5 // pred_check_branch
      %631 = sbr.rel (%p629) target = $region60
    $region59: #{detection_and_segmentation_forward.3} parent=5 // pred_region
      %s632 = ssub.s32 %s14, 2
      // Predicated region
      $region61: #{detection_and_segmentation_forward.3} parent=59 // pred_check
        %p633 = pneg %p169
      $region62: #{detection_and_segmentation_forward.3} parent=59 // pred_check_branch
        %635 = sbr.rel (%p633) target = $region64
      $region63: #{detection_and_segmentation_forward.3} parent=59 // pred_region
        %s636 = smul.u32 8, %s26
        %p637 = scmp.lt.s32.totalorder %s25, 1
        %s638 = scalar_select %p637, %s25, 1
        %p639 = scmp.lt.s32.totalorder %s636, 7
        %s640 = scalar_select %p639, %s636, 7
        %s641 = smul.addr %s638, 8
        %s642 = sadd.s32 %s640, %s641
        %s643 = smul.addr %s642, 4
        %s644 = scalar_lea.vmem %s5, %s643
      $region64: #{detection_and_segmentation_forward.3} parent=59 // pred_fallthru
        _
      // Predicated region
      $region65: #{detection_and_segmentation_forward.3} parent=59 // pred_check
        %p645 = pneg %p197
      $region66: #{detection_and_segmentation_forward.3} parent=59 // pred_check_branch
        %647 = sbr.rel (%p645) target = $region68
      $region67: #{detection_and_segmentation_forward.3} parent=59 // pred_region
        %s648 = smul.u32 8, %s26
        %p649 = scmp.lt.s32.totalorder %s25, 1
        %s650 = scalar_select %p649, %s25, 1
        %p651 = scmp.lt.s32.totalorder %s648, 7
        %s652 = scalar_select %p651, %s648, 7
        %s653 = smul.addr %s650, 8
        %s654 = sadd.s32 %s652, %s653
        %s655 = smul.addr %s654, 8
        %s656 = scalar_lea.vmem %s6, %s655
      $region68: #{detection_and_segmentation_forward.3} parent=59 // pred_fallthru
        _
      // Predicated region
      $region69: #{detection_and_segmentation_forward.3} parent=59 // pred_check
        %p657 = pneg %p223
      $region70: #{detection_and_segmentation_forward.3} parent=59 // pred_check_branch
        %659 = sbr.rel (%p657) target = $region72
      $region71: #{detection_and_segmentation_forward.3} parent=59 // pred_region
        %p660 = scmp.lt.s32.totalorder %s25, 1
        %s661 = scalar_select %p660, %s25, 1
        %s662 = smul.addr %s661, 8
        %s663 = scalar_lea.vmem %s7, %s662
      $region72: #{detection_and_segmentation_forward.3} parent=59 // pred_fallthru
        _
    $region60: #{detection_and_segmentation_forward.3} parent=5 // pred_fallthru
      _
  $region6: #{detection_and_segmentation_forward.3} parent=0 // loop_footer
    %s18 = sadd.s32 1, %s14
  $region7: #{detection_and_segmentation_forward.3} parent=0 // loop_footer_branch
    %13 = sbr.rel target = $region3
  $region8: #{detection_and_segmentation_forward.3} parent=0 // loop_exit
    _

// kernel: detection_and_segmentation_forward.5
$region0: #{detection_and_segmentation_forward.5}
  #allocation0 [shape = 'u32[]', space=smem, size = 0x4, offset = 0x4, fixed_abs, tag = 'smem constant byte address 0x4 - core index']
  #allocation1 [shape = 'u32[72,128]{1,0:T(1,128)}', space=vmem, size = 0x9000, scoped, tag = 'internal scratch']
  %s0 = inlined_call_operand.vmem [shape: f32[2,32], index: 0, kind: input, shape index: {}]
  %s1 = inlined_call_operand.vmem [shape: bf16[32,64], index: 1, kind: input, shape index: {}]
  %s2 = inlined_call_operand.vmem [shape: f32[1,64], index: 2, kind: input, shape index: {}]
  %s3 = inlined_call_operand.vmem [shape: bf16[64,128], index: 3, kind: input, shape index: {}]
  %s4 = inlined_call_operand.vmem [shape: f32[1,128], index: 4, kind: input, shape index: {}]
  %s5 = inlined_call_operand.vmem [shape: f32[2,128], index: 5, kind: output, shape index: {}]
  %s6 = sld [smem:[#allocation0]]
  $region30: #{detection_and_segmentation_forward.5} parent=0
    _
  %s8 = ssub.s32 1, %s6
  %s9 = scalar_select 0, %s8, %s6
  // Predicated region
  $region2: #{detection_and_segmentation_forward.5} parent=0 // pred_check
    _
  $region3: #{detection_and_segmentation_forward.5} parent=0 // pred_check_branch
    %11 = sbr.rel (0) target = $region5
  $region4: #{detection_and_segmentation_forward.5} parent=0 // pred_region
    _
  $region5: #{detection_and_segmentation_forward.5} parent=0 // pred_fallthru
    _
  // Predicated region
  $region6: #{detection_and_segmentation_forward.5} parent=0 // pred_check
    _
  $region7: #{detection_and_segmentation_forward.5} parent=0 // pred_check_branch
    %13 = sbr.rel (0) target = $region9
  $region8: #{detection_and_segmentation_forward.5} parent=0 // pred_region
    _
  $region9: #{detection_and_segmentation_forward.5} parent=0 // pred_fallthru
    _
  // Predicated region
  $region10: #{detection_and_segmentation_forward.5} parent=0 // pred_check
    _
  $region11: #{detection_and_segmentation_forward.5} parent=0 // pred_check_branch
    %15 = sbr.rel (0) target = $region13
  $region12: #{detection_and_segmentation_forward.5} parent=0 // pred_region
    _
  $region13: #{detection_and_segmentation_forward.5} parent=0 // pred_fallthru
    _
  // Predicated region
  $region14: #{detection_and_segmentation_forward.5} parent=0 // pred_check
    _
  $region15: #{detection_and_segmentation_forward.5} parent=0 // pred_check_branch
    %17 = sbr.rel (0) target = $region17
  $region16: #{detection_and_segmentation_forward.5} parent=0 // pred_region
    _
  $region17: #{detection_and_segmentation_forward.5} parent=0 // pred_fallthru
    _
  // Predicated region
  $region18: #{detection_and_segmentation_forward.5} parent=0 // pred_check
    _
  $region19: #{detection_and_segmentation_forward.5} parent=0 // pred_check_branch
    %19 = sbr.rel (0) target = $region21
  $region20: #{detection_and_segmentation_forward.5} parent=0 // pred_region
    _
  $region21: #{detection_and_segmentation_forward.5} parent=0 // pred_fallthru
    _
  %v21 = vld [vmem:[%s0] sm:$0x3]
  %v22 = vpack.c.bf16 %v21, %v21
  %v23 = vld [vmem:[%s1] sm:$0xf]
  %v24 = vld [vmem:[%s1 + $0x4] sm:$0xf]
  %v25 = vld [vmem:[%s1 + $0x8] sm:$0xf]
  %v26 = vld [vmem:[%s1 + $0xc] sm:$0xf]
  %v27 = vld [vmem:[%s2] sm:$0x1]
  %v29 = vperm.slane %v27, 0
  %v35 = vunpack.c.l.b16 %v23
  %v36 = vunpack.c.l.b16 %v24
  %v37 = vunpack.c.l.b16 %v25
  %v38 = vunpack.c.l.b16 %v26
  %v39 = vpack.c.b16 %v36, %v35
  %v40 = vpack.c.b16 %v38, %v37
  %vm43 = vcmask 261120
  %v45 = vsel %vm43, %v22, 0
  %47 = vmatpush.bf16.msra.mxu0 0
  %48 = vmatpush.bf16.msra.mxu0 0
  %49 = vmatpush.bf16.msra.mxu0 0
  %50 = vmatpush.bf16.msra.mxu0 0
  %51 = vmatpush.bf16.msra.mxu0 0
  %52 = vmatpush.bf16.msra.mxu0 0
  %53 = vmatpush.bf16.msra.mxu0 %v40
  %54 = vmatpush.bf16.msra.mxu0 %v39
  %55 = vmatmul.bf16.gmra.mxu0 %v45
  %v56 = vpop.f32.mrf.mxu0
  %v57 = vadd.f32 %v29, %v56
  %v58 = vpop.f32.mrf.mxu0
  %59 = vdwg.mxu0
  %v60 = vmax.f32 %v57, 0.0
  %v61 = vpack.c.bf16 %v60, %v60
  %v62 = vld [vmem:[%s3] sm:$0xf]
  %v63 = vld [vmem:[%s3 + $0x4] sm:$0xf]
  %v64 = vld [vmem:[%s3 + $0x8] sm:$0xf]
  %v65 = vld [vmem:[%s3 + $0xc] sm:$0xf]
  %v66 = vld [vmem:[%s3 + $0x10] sm:$0xf]
  %v67 = vld [vmem:[%s3 + $0x14] sm:$0xf]
  %v68 = vld [vmem:[%s3 + $0x18] sm:$0xf]
  %v69 = vld [vmem:[%s3 + $0x1c] sm:$0xf]
  %v70 = vld [vmem:[%s4] sm:$0x1]
  %v72 = vperm.slane %v70, 0
  %v82 = vunpack.c.l.b16 %v62
  %v83 = vunpack.c.l.b16 %v63
  %v84 = vunpack.c.l.b16 %v64
  %v85 = vunpack.c.l.b16 %v65
  %v86 = vunpack.c.l.b16 %v66
  %v87 = vunpack.c.l.b16 %v67
  %v88 = vunpack.c.l.b16 %v68
  %v89 = vunpack.c.l.b16 %v69
  %v90 = vpack.c.b16 %v83, %v82
  %v91 = vpack.c.b16 %v85, %v84
  %v92 = vpack.c.b16 %v87, %v86
  %v93 = vpack.c.b16 %v89, %v88
  %vm98 = vcmask 523264
  %v100 = vsel %vm98, %v61, 0
  %102 = vmatpush.bf16.msra.mxu0 0
  %103 = vmatpush.bf16.msra.mxu0 0
  %104 = vmatpush.bf16.msra.mxu0 0
  %105 = vmatpush.bf16.msra.mxu0 0
  %106 = vmatpush.bf16.msra.mxu0 %v93
  %107 = vmatpush.bf16.msra.mxu0 %v92
  %108 = vmatpush.bf16.msra.mxu0 %v91
  %109 = vmatpush.bf16.msra.mxu0 %v90
  %110 = vmatmul.bf16.gmra.mxu0 %v100
  %v111 = vpop.f32.mrf.mxu0
  %v112 = vadd.f32 %v72, %v111
  %v113 = vpop.f32.mrf.mxu0
  %114 = vdwg.mxu0
  %115 = vst [vmem:[%s5] sm:$0x3] %v112
  // Predicated region
  $region22: #{detection_and_segmentation_forward.5} parent=0 // pred_check
    _
  $region23: #{detection_and_segmentation_forward.5} parent=0 // pred_check_branch
    %117 = sbr.rel (0) target = $region25
  $region24: #{detection_and_segmentation_forward.5} parent=0 // pred_region
    _
  $region25: #{detection_and_segmentation_forward.5} parent=0 // pred_fallthru
    _
  // Predicated region
  $region26: #{detection_and_segmentation_forward.5} parent=0 // pred_check
    _
  $region27: #{detection_and_segmentation_forward.5} parent=0 // pred_check_branch
    %119 = sbr.rel (0) target = $region29
  $region28: #{detection_and_segmentation_forward.5} parent=0 // pred_region
    _
  $region29: #{detection_and_segmentation_forward.5} parent=0 // pred_fallthru
    _

// kernel: detection_and_segmentation_forward.4
$region0: #{detection_and_segmentation_forward.4}
  #allocation0 [shape = 'u32[]', space=smem, size = 0x4, offset = 0x4, fixed_abs, tag = 'smem constant byte address 0x4 - core index']
  #allocation1 [shape = 'u32[72,128]{1,0:T(1,128)}', space=vmem, size = 0x9000, scoped, tag = 'internal scratch']
  %s0 = inlined_call_operand.vmem [shape: bf16[2,10,10,32], index: 0, kind: input, shape index: {}]
  %s1 = inlined_call_operand.vmem [shape: bf16[9,32,32], index: 1, kind: input, shape index: {}]
  %s2 = inlined_call_operand.vmem [shape: f32[1,32], index: 2, kind: input, shape index: {}]
  %s3 = inlined_call_operand.vmem [shape: bf16[32,128], index: 3, kind: input, shape index: {}]
  %s4 = inlined_call_operand.vmem [shape: f32[1,128], index: 4, kind: input, shape index: {}]
  %s5 = inlined_call_operand.vmem [shape: f32[2,64,128], index: 5, kind: output, shape index: {}]
  %s6 = sld [smem:[#allocation0]]
  $region53: #{detection_and_segmentation_forward.4} parent=0
    _
  %s8 = ssub.s32 1, %s6
  %s9 = scalar_select 0, %s8, %s6
  loop: start=0, step=1, limit=4
  $region2: #{detection_and_segmentation_forward.4} parent=0 // loop_pre_header
    _
  $region3: #{detection_and_segmentation_forward.4} parent=0 // loop_header
    %s11 = sphi 0, %s15
    %p12 = scmp.ge.s32.totalorder %s11, 4
    %s21 = sphi 0, %s23
    %s24 = sphi 0, %s21
    %s25 = sphi 0, %s24
    %s41 = sphi 0, %s25
    %s45 = sphi 0, %s45
    %s47 = sphi 0, %s45
    %s48 = sphi 0, %s47
    %s62 = sphi 0, %s48
    %s66 = sphi 0, %s66
    %s68 = sphi 0, %s66
    %s69 = sphi 0, %s68
    %s83 = sphi 0, %s69
    %s87 = sphi 0, %s87
    %s89 = sphi 0, %s87
    %s90 = sphi 0, %s89
    %s104 = sphi 0, %s90
    %s108 = sphi 0, %s108
    %s110 = sphi 0, %s108
    %s111 = sphi 0, %s110
    %s125 = sphi 0, %s111
    %s131 = sphi 0, %s133
    %s134 = sphi 0, %s131
    %s135 = sphi 0, %s134
    %s151 = sphi 0, %s135
  $region4: #{detection_and_segmentation_forward.4} parent=0 // loop_header_branch
    %14 = sbr.rel (%p12) target = $region8
  $region5: #{detection_and_segmentation_forward.4} parent=0 // loop_body
    %s16 = ssub.s32 %s11, 1
    %s17 = ssub.s32 %s11, 2
    %s18 = sadd.s32 %s11, 1
    %s19 = ssub.s32 %s11, %s18
    %p20 = scmp.eq.s32.totalorder %s19, 0
    %s22 = sadd.s32 %s21, 1
    %s23 = scalar_select %p20, %s21, %s22
    %p26 = pneg %p20
    %p27 = scmp.eq.s32.totalorder %s11, 1
    %p28 = por %p26, %p27
    %p29 = scmp.ne.s32.totalorder %s21, %s24
    %p30 = scmp.eq.s32.totalorder %s11, 0
    %p31 = por %p29, %p30
    %p32 = scmp.ne.s32.totalorder %s21, %s24
    %p33 = scmp.eq.s32.totalorder %s16, 1
    %p34 = por %p32, %p33
    %p35 = scmp.ne.s32.totalorder %s24, %s25
    %p36 = scmp.eq.s32.totalorder %s16, 0
    %p37 = por %p35, %p36
    %p38 = scmp.ne.s32.totalorder %s24, %s25
    %p39 = scmp.eq.s32.totalorder %s17, 1
    %p40 = por %p38, %p39
    %p42 = scmp.ne.s32.totalorder %s25, %s41
    %p43 = scmp.eq.s32.totalorder %s17, 0
    %p44 = por %p42, %p43
    %s46 = sadd.s32 %s45, 1
    %p49 = scmp.eq.s32.totalorder %s11, 1
    %p50 = scmp.ne.s32.totalorder %s45, %s47
    %p51 = scmp.eq.s32.totalorder %s11, 0
    %p52 = por %p50, %p51
    %p53 = scmp.ne.s32.totalorder %s45, %s47
    %p54 = scmp.eq.s32.totalorder %s16, 1
    %p55 = por %p53, %p54
    %p56 = scmp.ne.s32.totalorder %s47, %s48
    %p57 = scmp.eq.s32.totalorder %s16, 0
    %p58 = por %p56, %p57
    %p59 = scmp.ne.s32.totalorder %s47, %s48
    %p60 = scmp.eq.s32.totalorder %s17, 1
    %p61 = por %p59, %p60
    %p63 = scmp.ne.s32.totalorder %s48, %s62
    %p64 = scmp.eq.s32.totalorder %s17, 0
    %p65 = por %p63, %p64
    %s67 = sadd.s32 %s66, 1
    %p70 = scmp.eq.s32.totalorder %s11, 1
    %p71 = scmp.ne.s32.totalorder %s66, %s68
    %p72 = scmp.eq.s32.totalorder %s11, 0
    %p73 = por %p71, %p72
    %p74 = scmp.ne.s32.totalorder %s66, %s68
    %p75 = scmp.eq.s32.totalorder %s16, 1
    %p76 = por %p74, %p75
    %p77 = scmp.ne.s32.totalorder %s68, %s69
    %p78 = scmp.eq.s32.totalorder %s16, 0
    %p79 = por %p77, %p78
    %p80 = scmp.ne.s32.totalorder %s68, %s69
    %p81 = scmp.eq.s32.totalorder %s17, 1
    %p82 = por %p80, %p81
    %p84 = scmp.ne.s32.totalorder %s69, %s83
    %p85 = scmp.eq.s32.totalorder %s17, 0
    %p86 = por %p84, %p85
    %s88 = sadd.s32 %s87, 1
    %p91 = scmp.eq.s32.totalorder %s11, 1
    %p92 = scmp.ne.s32.totalorder %s87, %s89
    %p93 = scmp.eq.s32.totalorder %s11, 0
    %p94 = por %p92, %p93
    %p95 = scmp.ne.s32.totalorder %s87, %s89
    %p96 = scmp.eq.s32.totalorder %s16, 1
    %p97 = por %p95, %p96
    %p98 = scmp.ne.s32.totalorder %s89, %s90
    %p99 = scmp.eq.s32.totalorder %s16, 0
    %p100 = por %p98, %p99
    %p101 = scmp.ne.s32.totalorder %s89, %s90
    %p102 = scmp.eq.s32.totalorder %s17, 1
    %p103 = por %p101, %p102
    %p105 = scmp.ne.s32.totalorder %s90, %s104
    %p106 = scmp.eq.s32.totalorder %s17, 0
    %p107 = por %p105, %p106
    %s109 = sadd.s32 %s108, 1
    %p112 = scmp.eq.s32.totalorder %s11, 1
    %p113 = scmp.ne.s32.totalorder %s108, %s110
    %p114 = scmp.eq.s32.totalorder %s11, 0
    %p115 = por %p113, %p114
    %p116 = scmp.ne.s32.totalorder %s108, %s110
    %p117 = scmp.eq.s32.totalorder %s16, 1
    %p118 = por %p116, %p117
    %p119 = scmp.ne.s32.totalorder %s110, %s111
    %p120 = scmp.eq.s32.totalorder %s16, 0
    %p121 = por %p119, %p120
    %p122 = scmp.ne.s32.totalorder %s110, %s111
    %p123 = scmp.eq.s32.totalorder %s17, 1
    %p124 = por %p122, %p123
    %p126 = scmp.ne.s32.totalorder %s111, %s125
    %p127 = scmp.eq.s32.totalorder %s17, 0
    %p128 = por %p126, %p127
    %s129 = ssub.s32 %s11, %s18
    %p130 = scmp.eq.s32.totalorder %s129, 0
    %s132 = sadd.s32 %s131, 1
    %s133 = scalar_select %p130, %s131, %s132
    %p136 = pneg %p130
    %p137 = scmp.eq.s32.totalorder %s11, 1
    %p138 = por %p136, %p137
    %p139 = scmp.ne.s32.totalorder %s131, %s134
    %p140 = scmp.eq.s32.totalorder %s11, 0
    %p141 = por %p139, %p140
    %p142 = scmp.ne.s32.totalorder %s131, %s134
    %p143 = scmp.eq.s32.totalorder %s16, 1
    %p144 = por %p142, %p143
    %p145 = scmp.ne.s32.totalorder %s134, %s135
    %p146 = scmp.eq.s32.totalorder %s16, 0
    %p147 = por %p145, %p146
    %p148 = scmp.ne.s32.totalorder %s134, %s135
    %p149 = scmp.eq.s32.totalorder %s17, 1
    %p150 = por %p148, %p149
    %p152 = scmp.ne.s32.totalorder %s135, %s151
    %p153 = scmp.eq.s32.totalorder %s17, 0
    %p154 = por %p152, %p153
    %p155 = scmp.le.s32.totalorder 1, %s11
    %p156 = scmp.lt.s32.totalorder %s11, 3
    %p157 = pnand %p155, %p156
    %p158 = pneg %p157
    // Predicated region
    $region9: #{detection_and_segmentation_forward.4} parent=5 // pred_check
      _
    $region10: #{detection_and_segmentation_forward.4} parent=5 // pred_check_branch
      %160 = sbr.rel (%p157) target = $region12
    $region11: #{detection_and_segmentation_forward.4} parent=5 // pred_region
      %s161 = ssub.s32 %s11, 1
      // Predicated region
      $region13: #{detection_and_segmentation_forward.4} parent=11 // pred_check
        %p162 = pneg %p58
      $region14: #{detection_and_segmentation_forward.4} parent=11 // pred_check_branch
        %164 = sbr.rel (%p162) target = $region16
      $region15: #{detection_and_segmentation_forward.4} parent=11 // pred_region
        _
      $region16: #{detection_and_segmentation_forward.4} parent=11 // pred_fallthru
        _
      // Predicated region
      $region17: #{detection_and_segmentation_forward.4} parent=11 // pred_check
        %p165 = pneg %p79
      $region18: #{detection_and_segmentation_forward.4} parent=11 // pred_check_branch
        %167 = sbr.rel (%p165) target = $region20
      $region19: #{detection_and_segmentation_forward.4} parent=11 // pred_region
        _
      $region20: #{detection_and_segmentation_forward.4} parent=11 // pred_fallthru
        _
      // Predicated region
      $region21: #{detection_and_segmentation_forward.4} parent=11 // pred_check
        %p168 = pneg %p100
      $region22: #{detection_and_segmentation_forward.4} parent=11 // pred_check_branch
        %170 = sbr.rel (%p168) target = $region24
      $region23: #{detection_and_segmentation_forward.4} parent=11 // pred_region
        _
      $region24: #{detection_and_segmentation_forward.4} parent=11 // pred_fallthru
        _
      // Predicated region
      $region25: #{detection_and_segmentation_forward.4} parent=11 // pred_check
        %p171 = pneg %p121
      $region26: #{detection_and_segmentation_forward.4} parent=11 // pred_check_branch
        %173 = sbr.rel (%p171) target = $region28
      $region27: #{detection_and_segmentation_forward.4} parent=11 // pred_region
        _
      $region28: #{detection_and_segmentation_forward.4} parent=11 // pred_fallthru
        _
    $region12: #{detection_and_segmentation_forward.4} parent=5 // pred_fallthru
      _
    %p174 = scmp.lt.s32.totalorder %s11, 2
    // Predicated region
    $region29: #{detection_and_segmentation_forward.4} parent=5 // pred_check
      %p175 = pneg %p174
    $region30: #{detection_and_segmentation_forward.4} parent=5 // pred_check_branch
      %177 = sbr.rel (%p175) target = $region32
    $region31: #{detection_and_segmentation_forward.4} parent=5 // pred_region
      // Predicated region
      $region33: #{detection_and_segmentation_forward.4} parent=31 // pred_check
        %p178 = pneg %p31
      $region34: #{detection_and_segmentation_forward.4} parent=31 // pred_check_branch
        %180 = sbr.rel (%p178) target = $region36
      $region35: #{detection_and_segmentation_forward.4} parent=31 // pred_region
        %p181 = scmp.lt.s32.totalorder %s11, 1
        %s182 = scalar_select %p181, %s11, 1
        %s183 = smul.addr %s182, 20
        %s184 = smul.addr %s183, 4
        %s185 = scalar_lea.vmem %s0, %s184
      $region36: #{detection_and_segmentation_forward.4} parent=31 // pred_fallthru
        _
    $region32: #{detection_and_segmentation_forward.4} parent=5 // pred_fallthru
      _
    %p186 = scmp.le.s32.totalorder 1, %s11
    %p187 = scmp.lt.s32.totalorder %s11, 3
    %p188 = pnand %p186, %p187
    %p189 = pneg %p188
    // Predicated region
    $region37: #{detection_and_segmentation_forward.4} parent=5 // pred_check
      _
    $region38: #{detection_and_segmentation_forward.4} parent=5 // pred_check_branch
      %191 = sbr.rel (%p188) target = $region40
    $region39: #{detection_and_segmentation_forward.4} parent=5 // pred_region
      %s192 = ssub.s32 %s11, 1
      %p193 = scmp.lt.s32.totalorder %s16, 1
      %s194 = scalar_select %p193, %s16, 1
      %s195 = smul.addr %s194, 20
      %s196 = smul.addr %s195, 4
      %s197 = scalar_lea.vmem %s0, %s196
      %p198 = pneg %p37
      %p199 = pneg %p34
      %p200 = pneg %p58
      %p201 = pneg %p55
      %p202 = pneg %p79
      %p203 = pneg %p76
      %p204 = pneg %p100
      %p205 = pneg %p97
      %p206 = pneg %p121
      %p207 = pneg %p118
      %p208 = pneg %p147
      %p209 = pneg %p144
      %p210 = scmp.lt.s32.totalorder %s16, 1
      %s211 = scalar_select %p210, %s16, 1
      %s212 = smul.addr %s211, 8
      %s213 = smul.addr %s212, 8
      %s214 = scalar_lea.vmem %s5, %s213
      %p215 = scmp.lt.s32.totalorder %s16, 1
      %s216 = scalar_select %p215, %s16, 1
      %s217 = smul.addr %s216, 20
      %s218 = smul.addr %s217, 4
      %s219 = scalar_lea.vmem %s0, %s218
      %p220 = scmp.lt.s32.totalorder %s16, 1
      %s221 = scalar_select %p220, %s16, 1
      %s222 = smul.addr %s221, 8
      %s223 = smul.addr %s222, 8
      %s224 = scalar_lea.vmem %s5, %s223
      %v226 = vld [vmem:[%s219] sm:$0xf]
      %v227 = vld [vmem:[%s219 + $0x8] sm:$0xf]
      %v228 = vld [vmem:[%s219 + $0x10] sm:$0xf]
      %v229 = vld [vmem:[%s219 + $0x18] sm:$0xf]
      %v230 = vld [vmem:[%s219 + $0x20] sm:$0xf]
      %v231 = vld [vmem:[%s219 + $0x28] sm:$0xf]
      %v232 = vld [vmem:[%s219 + $0x30] sm:$0xf]
      %v233 = vld [vmem:[%s219 + $0x38] sm:$0xf]
      %v234 = vld [vmem:[%s1] sm:$0xf]
      %v235 = vld [vmem:[%s1 + $0x4] sm:$0xf]
      %v236 = vld [vmem:[%s1 + $0x8] sm:$0xf]
      %v237 = vld [vmem:[%s1 + $0xc] sm:$0xf]
      %v238 = vld [vmem:[%s219 + $0x4] sm:$0x1]
      %v239 = vld [vmem:[%s219 + $0xc] sm:$0x1]
      %v240 = vld [vmem:[%s219 + $0x14] sm:$0x1]
      %v241 = vld [vmem:[%s219 + $0x1c] sm:$0x1]
      %v242 = vld [vmem:[%s219 + $0x24] sm:$0x1]
      %v243 = vld [vmem:[%s219 + $0x2c] sm:$0x1]
      %v244 = vld [vmem:[%s219 + $0x34] sm:$0x1]
      %v245 = vld [vmem:[%s219 + $0x3c] sm:$0x1]
      %vm246 = vsmask.f32 3328
      %vm247 = vsmask.f32 7440
      %vm248 = vmor %vm246, %vm247
      %v250 = vshrl.u32 %v226, 16
      %v252 = vrot.slane %v250, 4
      %v253 = vshll.u32 %v226, 16
      %v255 = vrot.slane %v253, 5
      %v256 = vor.u32 %v252, %v255
      %v257 = vrot.slane %v256, 4
      %v259 = vshll.u32 %v238, 16
      %v261 = vrot.slane %v259, 5
      %v262 = vsel %vm248, %v257, %v261
      %v264 = vshrl.u32 %v227, 16
      %v266 = vrot.slane %v264, 4
      %v267 = vshll.u32 %v227, 16
      %v269 = vrot.slane %v267, 5
      %v270 = vor.u32 %v266, %v269
      %v271 = vrot.slane %v270, 4
      %v273 = vshll.u32 %v239, 16
      %v275 = vrot.slane %v273, 5
      %v276 = vsel %vm248, %v271, %v275
      %v278 = vshrl.u32 %v228, 16
      %v280 = vrot.slane %v278, 4
      %v281 = vshll.u32 %v228, 16
      %v283 = vrot.slane %v281, 5
      %v284 = vor.u32 %v280, %v283
      %v285 = vrot.slane %v284, 4
      %v287 = vshll.u32 %v240, 16
      %v289 = vrot.slane %v287, 5
      %v290 = vsel %vm248, %v285, %v289
      %v292 = vshrl.u32 %v229, 16
      %v294 = vrot.slane %v292, 4
      %v295 = vshll.u32 %v229, 16
      %v297 = vrot.slane %v295, 5
      %v298 = vor.u32 %v294, %v297
      %v299 = vrot.slane %v298, 4
      %v301 = vshll.u32 %v241, 16
      %v303 = vrot.slane %v301, 5
      %v304 = vsel %vm248, %v299, %v303
      %v306 = vshrl.u32 %v230, 16
      %v308 = vrot.slane %v306, 4
      %v309 = vshll.u32 %v230, 16
      %v311 = vrot.slane %v309, 5
      %v312 = vor.u32 %v308, %v311
      %v313 = vrot.slane %v312, 4
      %v315 = vshll.u32 %v242, 16
      %v317 = vrot.slane %v315, 5
      %v318 = vsel %vm248, %v313, %v317
      %v320 = vshrl.u32 %v231, 16
      %v322 = vrot.slane %v320, 4
      %v323 = vshll.u32 %v231, 16
      %v325 = vrot.slane %v323, 5
      %v326 = vor.u32 %v322, %v325
      %v327 = vrot.slane %v326, 4
      %v329 = vshll.u32 %v243, 16
      %v331 = vrot.slane %v329, 5
      %v332 = vsel %vm248, %v327, %v331
      %v334 = vshrl.u32 %v232, 16
      %v336 = vrot.slane %v334, 4
      %v337 = vshll.u32 %v232, 16
      %v339 = vrot.slane %v337, 5
      %v340 = vor.u32 %v336, %v339
      %v341 = vrot.slane %v340, 4
      %v343 = vshll.u32 %v244, 16
      %v345 = vrot.slane %v343, 5
      %v346 = vsel %vm248, %v341, %v345
      %v348 = vshrl.u32 %v233, 16
      %v350 = vrot.slane %v348, 4
      %v351 = vshll.u32 %v233, 16
      %v353 = vrot.slane %v351, 5
      %v354 = vor.u32 %v350, %v353
      %v355 = vrot.slane %v354, 4
      %v357 = vshll.u32 %v245, 16
      %v359 = vrot.slane %v357, 5
      %v360 = vsel %vm248, %v355, %v359
      %s361 = scalar_lea.vmem %s1, 16
      %v362 = vld [vmem:[%s361] sm:$0xf]
      %v363 = vld [vmem:[%s361 + $0x4] sm:$0xf]
      %v364 = vld [vmem:[%s361 + $0x8] sm:$0xf]
      %v365 = vld [vmem:[%s361 + $0xc] sm:$0xf]
      %v366 = vunpack.c.l.b16 %v262
      %v367 = vunpack.c.l.b16 %v276
      %v368 = vunpack.c.l.b16 %v290
      %v369 = vunpack.c.l.b16 %v304
      %v370 = vunpack.c.l.b16 %v318
      %v371 = vunpack.c.l.b16 %v332
      %v372 = vunpack.c.l.b16 %v346
      %v373 = vunpack.c.l.b16 %v360
      %v374 = vpack.c.b16 %v367, %v366
      %v375 = vpack.c.b16 %v369, %v368
      %v376 = vpack.c.b16 %v371, %v370
      %v377 = vpack.c.b16 %v373, %v372
      %v382 = vunpack.c.l.b16 %v362
      %v383 = vunpack.c.l.b16 %v363
      %v384 = vunpack.c.l.b16 %v364
      %v385 = vunpack.c.l.b16 %v365
      %v386 = vpack.c.b16 %v383, %v382
      %v387 = vpack.c.b16 %v385, %v384
      %vm390 = vcmask 261120
      %v392 = vsel %vm390, %v374, 0
      %v395 = vsel %vm390, %v375, 0
      %v398 = vsel %vm390, %v376, 0
      %v401 = vsel %vm390, %v377, 0
      %403 = vmatpush.bf16.msra.mxu0 0
      %404 = vmatpush.bf16.msra.mxu0 0
      %405 = vmatpush.bf16.msra.mxu0 0
      %406 = vmatpush.bf16.msra.mxu0 0
      %407 = vmatpush.bf16.msra.mxu0 0
      %408 = vmatpush.bf16.msra.mxu0 0
      %409 = vmatpush.bf16.msra.mxu0 %v387
      %410 = vmatpush.bf16.msra.mxu0 %v386
      %411 = vmatmul.bf16.gmra.mxu0 %v392
      %v412 = vpop.f32.mrf.mxu0
      %v413 = vadd.f32 0.0, %v412
      %v414 = vpop.f32.mrf.mxu0
      %v415 = vadd.f32 0.0, %v414
      %416 = vmatmul.bf16.gmra.mxu0 %v395
      %v417 = vpop.f32.mrf.mxu0
      %v418 = vadd.f32 0.0, %v417
      %v419 = vpop.f32.mrf.mxu0
      %v420 = vadd.f32 0.0, %v419
      %421 = vmatmul.bf16.gmra.mxu0 %v398
      %v422 = vpop.f32.mrf.mxu0
      %v423 = vadd.f32 0.0, %v422
      %v424 = vpop.f32.mrf.mxu0
      %v425 = vadd.f32 0.0, %v424
      %426 = vmatmul.bf16.gmra.mxu0 %v401
      %v427 = vpop.f32.mrf.mxu0
      %v428 = vadd.f32 0.0, %v427
      %v429 = vpop.f32.mrf.mxu0
      %v430 = vadd.f32 0.0, %v429
      %431 = vdwg.mxu0
      %v440 = vunpack.c.l.b16 %v226
      %v441 = vunpack.c.l.b16 %v227
      %v442 = vunpack.c.l.b16 %v228
      %v443 = vunpack.c.l.b16 %v229
      %v444 = vunpack.c.l.b16 %v230
      %v445 = vunpack.c.l.b16 %v231
      %v446 = vunpack.c.l.b16 %v232
      %v447 = vunpack.c.l.b16 %v233
      %v448 = vpack.c.b16 %v441, %v440
      %v449 = vpack.c.b16 %v443, %v442
      %v450 = vpack.c.b16 %v445, %v444
      %v451 = vpack.c.b16 %v447, %v446
      %v456 = vunpack.c.l.b16 %v234
      %v457 = vunpack.c.l.b16 %v235
      %v458 = vunpack.c.l.b16 %v236
      %v459 = vunpack.c.l.b16 %v237
      %v460 = vpack.c.b16 %v457, %v456
      %v461 = vpack.c.b16 %v459, %v458
      %v465 = vsel %vm390, %v448, 0
      %v468 = vsel %vm390, %v449, 0
      %v471 = vsel %vm390, %v450, 0
      %v474 = vsel %vm390, %v451, 0
      %476 = vmatpush.bf16.msra.mxu0 0
      %477 = vmatpush.bf16.msra.mxu0 0
      %478 = vmatpush.bf16.msra.mxu0 0
      %479 = vmatpush.bf16.msra.mxu0 0
      %480 = vmatpush.bf16.msra.mxu0 0
      %481 = vmatpush.bf16.msra.mxu0 0
      %482 = vmatpush.bf16.msra.mxu0 %v461
      %483 = vmatpush.bf16.msra.mxu0 %v460
      %484 = vmatmul.bf16.gmra.mxu0 %v465
      %v485 = vpop.f32.mrf.mxu0
      %v486 = vadd.f32 %v413, %v485
      %v487 = vpop.f32.mrf.mxu0
      %v488 = vadd.f32 %v415, %v487
      %489 = vmatmul.bf16.gmra.mxu0 %v468
      %v490 = vpop.f32.mrf.mxu0
      %v491 = vadd.f32 %v418, %v490
      %v492 = vpop.f32.mrf.mxu0
      %v493 = vadd.f32 %v420, %v492
      %494 = vmatmul.bf16.gmra.mxu0 %v471
      %v495 = vpop.f32.mrf.mxu0
      %v496 = vadd.f32 %v423, %v495
      %v497 = vpop.f32.mrf.mxu0
      %v498 = vadd.f32 %v425, %v497
      %499 = vmatmul.bf16.gmra.mxu0 %v474
      %v500 = vpop.f32.mrf.mxu0
      %v501 = vadd.f32 %v428, %v500
      %v502 = vpop.f32.mrf.mxu0
      %v503 = vadd.f32 %v430, %v502
      %504 = vdwg.mxu0
      %v505 = vld [vmem:[%s219] sm:$0xe]
      %v506 = vld [vmem:[%s219 + $0x8] sm:$0xe]
      %v507 = vld [vmem:[%s219 + $0x10] sm:$0xe]
      %v508 = vld [vmem:[%s219 + $0x18] sm:$0xe]
      %v509 = vld [vmem:[%s219 + $0x20] sm:$0xe]
      %v510 = vld [vmem:[%s219 + $0x28] sm:$0xe]
      %v511 = vld [vmem:[%s219 + $0x30] sm:$0xe]
      %v512 = vld [vmem:[%s219 + $0x38] sm:$0xe]
      %vm529 = vcmask 1042432
      %vm530 = vcmask 1046532
      %vm531 = vmor %vm529, %vm530
      %v532 = vrot.slane %v505, 5
      %v533 = vrot.slane %v532, 4
      %v534 = vrot.slane %v238, 5
      %v535 = vsel %vm531, %v533, %v534
      %v536 = vrot.slane %v506, 5
      %v537 = vrot.slane %v536, 4
      %v538 = vrot.slane %v239, 5
      %v539 = vsel %vm531, %v537, %v538
      %v540 = vrot.slane %v507, 5
      %v541 = vrot.slane %v540, 4
      %v542 = vrot.slane %v240, 5
      %v543 = vsel %vm531, %v541, %v542
      %v544 = vrot.slane %v508, 5
      %v545 = vrot.slane %v544, 4
      %v546 = vrot.slane %v241, 5
      %v547 = vsel %vm531, %v545, %v546
      %v548 = vrot.slane %v509, 5
      %v549 = vrot.slane %v548, 4
      %v550 = vrot.slane %v242, 5
      %v551 = vsel %vm531, %v549, %v550
      %v552 = vrot.slane %v510, 5
      %v553 = vrot.slane %v552, 4
      %v554 = vrot.slane %v243, 5
      %v555 = vsel %vm531, %v553, %v554
      %v556 = vrot.slane %v511, 5
      %v557 = vrot.slane %v556, 4
      %v558 = vrot.slane %v244, 5
      %v559 = vsel %vm531, %v557, %v558
      %v560 = vrot.slane %v512, 5
      %v561 = vrot.slane %v560, 4
      %v562 = vrot.slane %v245, 5
      %v563 = vsel %vm531, %v561, %v562
      %s564 = scalar_lea.vmem %s1, 32
      %v565 = vld [vmem:[%s564] sm:$0xf]
      %v566 = vld [vmem:[%s564 + $0x4] sm:$0xf]
      %v567 = vld [vmem:[%s564 + $0x8] sm:$0xf]
      %v568 = vld [vmem:[%s564 + $0xc] sm:$0xf]
      %v569 = vunpack.c.l.b16 %v535
      %v570 = vunpack.c.l.b16 %v539
      %v571 = vunpack.c.l.b16 %v543
      %v572 = vunpack.c.l.b16 %v547
      %v573 = vunpack.c.l.b16 %v551
      %v574 = vunpack.c.l.b16 %v555
      %v575 = vunpack.c.l.b16 %v559
      %v576 = vunpack.c.l.b16 %v563
      %v577 = vpack.c.b16 %v570, %v569
      %v578 = vpack.c.b16 %v572, %v571
      %v579 = vpack.c.b16 %v574, %v573
      %v580 = vpack.c.b16 %v576, %v575
      %v585 = vunpack.c.l.b16 %v565
      %v586 = vunpack.c.l.b16 %v566
      %v587 = vunpack.c.l.b16 %v567
      %v588 = vunpack.c.l.b16 %v568
      %v589 = vpack.c.b16 %v586, %v585
      %v590 = vpack.c.b16 %v588, %v587
      %v594 = vsel %vm390, %v577, 0
      %v597 = vsel %vm390, %v578, 0
      %v600 = vsel %vm390, %v579, 0
      %v603 = vsel %vm390, %v580, 0
      %605 = vmatpush.bf16.msra.mxu0 0
      %606 = vmatpush.bf16.msra.mxu0 0
      %607 = vmatpush.bf16.msra.mxu0 0
      %608 = vmatpush.bf16.msra.mxu0 0
      %609 = vmatpush.bf16.msra.mxu0 0
      %610 = vmatpush.bf16.msra.mxu0 0
      %611 = vmatpush.bf16.msra.mxu0 %v590
      %612 = vmatpush.bf16.msra.mxu0 %v589
      %613 = vmatmul.bf16.gmra.mxu0 %v594
      %v614 = vpop.f32.mrf.mxu0
      %v615 = vadd.f32 0.0, %v614
      %v616 = vpop.f32.mrf.mxu0
      %v617 = vadd.f32 0.0, %v616
      %618 = vmatmul.bf16.gmra.mxu0 %v597
      %v619 = vpop.f32.mrf.mxu0
      %v620 = vadd.f32 0.0, %v619
      %v621 = vpop.f32.mrf.mxu0
      %v622 = vadd.f32 0.0, %v621
      %623 = vmatmul.bf16.gmra.mxu0 %v600
      %v624 = vpop.f32.mrf.mxu0
      %v625 = vadd.f32 0.0, %v624
      %v626 = vpop.f32.mrf.mxu0
      %v627 = vadd.f32 0.0, %v626
      %628 = vmatmul.bf16.gmra.mxu0 %v603
      %v629 = vpop.f32.mrf.mxu0
      %v630 = vadd.f32 0.0, %v629
      %v631 = vpop.f32.mrf.mxu0
      %v632 = vadd.f32 0.0, %v631
      %633 = vdwg.mxu0
      %v634 = vadd.f32 %v486, %v615
      %v635 = vadd.f32 %v488, %v617
      %v636 = vadd.f32 %v491, %v620
      %v637 = vadd.f32 %v493, %v622
      %v638 = vadd.f32 %v496, %v625
      %v639 = vadd.f32 %v498, %v627
      %v640 = vadd.f32 %v501, %v630
      %v641 = vadd.f32 %v503, %v632
      %s642 = scalar_lea.vmem %s219, 8
      %v643 = vld [vmem:[%s642] sm:$0xf]
      %v644 = vld [vmem:[%s642 + $0x8] sm:$0xf]
      %v645 = vld [vmem:[%s642 + $0x10] sm:$0xf]
      %v646 = vld [vmem:[%s642 + $0x18] sm:$0xf]
      %v647 = vld [vmem:[%s642 + $0x20] sm:$0xf]
      %v648 = vld [vmem:[%s642 + $0x28] sm:$0xf]
      %v649 = vld [vmem:[%s642 + $0x30] sm:$0xf]
      %v650 = vld [vmem:[%s642 + $0x38] sm:$0xf]
      %s651 = scalar_lea.vmem %s1, 48
      %v652 = vld [vmem:[%s651] sm:$0xf]
      %v653 = vld [vmem:[%s651 + $0x4] sm:$0xf]
      %v654 = vld [vmem:[%s651 + $0x8] sm:$0xf]
      %v655 = vld [vmem:[%s651 + $0xc] sm:$0xf]
      %v664 = vunpack.c.l.b16 %v643
      %v665 = vunpack.c.l.b16 %v644
      %v666 = vunpack.c.l.b16 %v645
      %v667 = vunpack.c.l.b16 %v646
      %v668 = vunpack.c.l.b16 %v647
      %v669 = vunpack.c.l.b16 %v648
      %v670 = vunpack.c.l.b16 %v649
      %v671 = vunpack.c.l.b16 %v650
      %v672 = vpack.c.b16 %v665, %v664
      %v673 = vpack.c.b16 %v667, %v666
      %v674 = vpack.c.b16 %v669, %v668
      %v675 = vpack.c.b16 %v671, %v670
      %v680 = vunpack.c.l.b16 %v652
      %v681 = vunpack.c.l.b16 %v653
      %v682 = vunpack.c.l.b16 %v654
      %v683 = vunpack.c.l.b16 %v655
      %v684 = vpack.c.b16 %v681, %v680
      %v685 = vpack.c.b16 %v683, %v682
      %v689 = vsel %vm390, %v672, 0
      %v692 = vsel %vm390, %v673, 0
      %v695 = vsel %vm390, %v674, 0
      %v698 = vsel %vm390, %v675, 0
      %700 = vmatpush.bf16.msra.mxu0 0
      %701 = vmatpush.bf16.msra.mxu0 0
      %702 = vmatpush.bf16.msra.mxu0 0
      %703 = vmatpush.bf16.msra.mxu0 0
      %704 = vmatpush.bf16.msra.mxu0 0
      %705 = vmatpush.bf16.msra.mxu0 0
      %706 = vmatpush.bf16.msra.mxu0 %v685
      %707 = vmatpush.bf16.msra.mxu0 %v684
      %708 = vmatmul.bf16.gmra.mxu0 %v689
      %v709 = vpop.f32.mrf.mxu0
      %v710 = vadd.f32 0.0, %v709
      %v711 = vpop.f32.mrf.mxu0
      %v712 = vadd.f32 0.0, %v711
      %713 = vmatmul.bf16.gmra.mxu0 %v692
      %v714 = vpop.f32.mrf.mxu0
      %v715 = vadd.f32 0.0, %v714
      %v716 = vpop.f32.mrf.mxu0
      %v717 = vadd.f32 0.0, %v716
      %718 = vmatmul.bf16.gmra.mxu0 %v695
      %v719 = vpop.f32.mrf.mxu0
      %v720 = vadd.f32 0.0, %v719
      %v721 = vpop.f32.mrf.mxu0
      %v722 = vadd.f32 0.0, %v721
      %723 = vmatmul.bf16.gmra.mxu0 %v698
      %v724 = vpop.f32.mrf.mxu0
      %v725 = vadd.f32 0.0, %v724
      %v726 = vpop.f32.mrf.mxu0
      %v727 = vadd.f32 0.0, %v726
      %728 = vdwg.mxu0
      %v729 = vadd.f32 %v634, %v710
      %v730 = vadd.f32 %v635, %v712
      %v731 = vadd.f32 %v636, %v715
      %v732 = vadd.f32 %v637, %v717
      %v733 = vadd.f32 %v638, %v720
      %v734 = vadd.f32 %v639, %v722
      %v735 = vadd.f32 %v640, %v725
      %v736 = vadd.f32 %v641, %v727
      %v737 = vld [vmem:[%s642] sm:$0xf]
      %v738 = vld [vmem:[%s642 + $0x4] sm:$0x1]
      %v739 = vld [vmem:[%s642 + $0x8] sm:$0xf]
      %v740 = vld [vmem:[%s642 + $0xc] sm:$0x1]
      %v741 = vld [vmem:[%s642 + $0x10] sm:$0xf]
      %v742 = vld [vmem:[%s642 + $0x14] sm:$0x1]
      %v743 = vld [vmem:[%s642 + $0x18] sm:$0xf]
      %v744 = vld [vmem:[%s642 + $0x1c] sm:$0x1]
      %v745 = vld [vmem:[%s642 + $0x20] sm:$0xf]
      %v746 = vld [vmem:[%s642 + $0x24] sm:$0x1]
      %v747 = vld [vmem:[%s642 + $0x28] sm:$0xf]
      %v748 = vld [vmem:[%s642 + $0x2c] sm:$0x1]
      %v749 = vld [vmem:[%s642 + $0x30] sm:$0xf]
      %v750 = vld [vmem:[%s642 + $0x34] sm:$0x1]
      %v751 = vld [vmem:[%s642 + $0x38] sm:$0xf]
      %v752 = vld [vmem:[%s642 + $0x3c] sm:$0x1]
      %v754 = vshrl.u32 %v737, 16
      %v756 = vrot.slane %v754, 4
      %v757 = vshll.u32 %v737, 16
      %v759 = vrot.slane %v757, 5
      %v760 = vor.u32 %v756, %v759
      %v761 = vrot.slane %v760, 4
      %v763 = vshll.u32 %v738, 16
      %v765 = vrot.slane %v763, 5
      %v766 = vsel %vm248, %v761, %v765
      %v768 = vshrl.u32 %v739, 16
      %v770 = vrot.slane %v768, 4
      %v771 = vshll.u32 %v739, 16
      %v773 = vrot.slane %v771, 5
      %v774 = vor.u32 %v770, %v773
      %v775 = vrot.slane %v774, 4
      %v777 = vshll.u32 %v740, 16
      %v779 = vrot.slane %v777, 5
      %v780 = vsel %vm248, %v775, %v779
      %v782 = vshrl.u32 %v741, 16
      %v784 = vrot.slane %v782, 4
      %v785 = vshll.u32 %v741, 16
      %v787 = vrot.slane %v785, 5
      %v788 = vor.u32 %v784, %v787
      %v789 = vrot.slane %v788, 4
      %v791 = vshll.u32 %v742, 16
      %v793 = vrot.slane %v791, 5
      %v794 = vsel %vm248, %v789, %v793
      %v796 = vshrl.u32 %v743, 16
      %v798 = vrot.slane %v796, 4
      %v799 = vshll.u32 %v743, 16
      %v801 = vrot.slane %v799, 5
      %v802 = vor.u32 %v798, %v801
      %v803 = vrot.slane %v802, 4
      %v805 = vshll.u32 %v744, 16
      %v807 = vrot.slane %v805, 5
      %v808 = vsel %vm248, %v803, %v807
      %v810 = vshrl.u32 %v745, 16
      %v812 = vrot.slane %v810, 4
      %v813 = vshll.u32 %v745, 16
      %v815 = vrot.slane %v813, 5
      %v816 = vor.u32 %v812, %v815
      %v817 = vrot.slane %v816, 4
      %v819 = vshll.u32 %v746, 16
      %v821 = vrot.slane %v819, 5
      %v822 = vsel %vm248, %v817, %v821
      %v824 = vshrl.u32 %v747, 16
      %v826 = vrot.slane %v824, 4
      %v827 = vshll.u32 %v747, 16
      %v829 = vrot.slane %v827, 5
      %v830 = vor.u32 %v826, %v829
      %v831 = vrot.slane %v830, 4
      %v833 = vshll.u32 %v748, 16
      %v835 = vrot.slane %v833, 5
      %v836 = vsel %vm248, %v831, %v835
      %v838 = vshrl.u32 %v749, 16
      %v840 = vrot.slane %v838, 4
      %v841 = vshll.u32 %v749, 16
      %v843 = vrot.slane %v841, 5
      %v844 = vor.u32 %v840, %v843
      %v845 = vrot.slane %v844, 4
      %v847 = vshll.u32 %v750, 16
      %v849 = vrot.slane %v847, 5
      %v850 = vsel %vm248, %v845, %v849
      %v852 = vshrl.u32 %v751, 16
      %v854 = vrot.slane %v852, 4
      %v855 = vshll.u32 %v751, 16
      %v857 = vrot.slane %v855, 5
      %v858 = vor.u32 %v854, %v857
      %v859 = vrot.slane %v858, 4
      %v861 = vshll.u32 %v752, 16
      %v863 = vrot.slane %v861, 5
      %v864 = vsel %vm248, %v859, %v863
      %s865 = scalar_lea.vmem %s1, 64
      %v866 = vld [vmem:[%s865] sm:$0xf]
      %v867 = vld [vmem:[%s865 + $0x4] sm:$0xf]
      %v868 = vld [vmem:[%s865 + $0x8] sm:$0xf]
      %v869 = vld [vmem:[%s865 + $0xc] sm:$0xf]
      %v870 = vunpack.c.l.b16 %v766
      %v871 = vunpack.c.l.b16 %v780
      %v872 = vunpack.c.l.b16 %v794
      %v873 = vunpack.c.l.b16 %v808
      %v874 = vunpack.c.l.b16 %v822
      %v875 = vunpack.c.l.b16 %v836
      %v876 = vunpack.c.l.b16 %v850
      %v877 = vunpack.c.l.b16 %v864
      %v878 = vpack.c.b16 %v871, %v870
      %v879 = vpack.c.b16 %v873, %v872
      %v880 = vpack.c.b16 %v875, %v874
      %v881 = vpack.c.b16 %v877, %v876
      %v886 = vunpack.c.l.b16 %v866
      %v887 = vunpack.c.l.b16 %v867
      %v888 = vunpack.c.l.b16 %v868
      %v889 = vunpack.c.l.b16 %v869
      %v890 = vpack.c.b16 %v887, %v886
      %v891 = vpack.c.b16 %v889, %v888
      %v895 = vsel %vm390, %v878, 0
      %v898 = vsel %vm390, %v879, 0
      %v901 = vsel %vm390, %v880, 0
      %v904 = vsel %vm390, %v881, 0
      %906 = vmatpush.bf16.msra.mxu0 0
      %907 = vmatpush.bf16.msra.mxu0 0
      %908 = vmatpush.bf16.msra.mxu0 0
      %909 = vmatpush.bf16.msra.mxu0 0
      %910 = vmatpush.bf16.msra.mxu0 0
      %911 = vmatpush.bf16.msra.mxu0 0
      %912 = vmatpush.bf16.msra.mxu0 %v891
      %913 = vmatpush.bf16.msra.mxu0 %v890
      %914 = vmatmul.bf16.gmra.mxu0 %v895
      %v915 = vpop.f32.mrf.mxu0
      %v916 = vadd.f32 0.0, %v915
      %v917 = vpop.f32.mrf.mxu0
      %v918 = vadd.f32 0.0, %v917
      %919 = vmatmul.bf16.gmra.mxu0 %v898
      %v920 = vpop.f32.mrf.mxu0
      %v921 = vadd.f32 0.0, %v920
      %v922 = vpop.f32.mrf.mxu0
      %v923 = vadd.f32 0.0, %v922
      %924 = vmatmul.bf16.gmra.mxu0 %v901
      %v925 = vpop.f32.mrf.mxu0
      %v926 = vadd.f32 0.0, %v925
      %v927 = vpop.f32.mrf.mxu0
      %v928 = vadd.f32 0.0, %v927
      %929 = vmatmul.bf16.gmra.mxu0 %v904
      %v930 = vpop.f32.mrf.mxu0
      %v931 = vadd.f32 0.0, %v930
      %v932 = vpop.f32.mrf.mxu0
      %v933 = vadd.f32 0.0, %v932
      %934 = vdwg.mxu0
      %v935 = vadd.f32 %v729, %v916
      %v936 = vadd.f32 %v730, %v918
      %v937 = vadd.f32 %v731, %v921
      %v938 = vadd.f32 %v732, %v923
      %v939 = vadd.f32 %v733, %v926
      %v940 = vadd.f32 %v734, %v928
      %v941 = vadd.f32 %v735, %v931
      %v942 = vadd.f32 %v736, %v933
      %v943 = vld [vmem:[%s642] sm:$0xe]
      %v944 = vld [vmem:[%s642 + $0x8] sm:$0xe]
      %v945 = vld [vmem:[%s642 + $0x10] sm:$0xe]
      %v946 = vld [vmem:[%s642 + $0x18] sm:$0xe]
      %v947 = vld [vmem:[%s642 + $0x20] sm:$0xe]
      %v948 = vld [vmem:[%s642 + $0x28] sm:$0xe]
      %v949 = vld [vmem:[%s642 + $0x30] sm:$0xe]
      %v950 = vld [vmem:[%s642 + $0x38] sm:$0xe]
      %v967 = vrot.slane %v943, 5
      %v968 = vrot.slane %v967, 4
      %v969 = vrot.slane %v738, 5
      %v970 = vsel %vm531, %v968, %v969
      %v971 = vrot.slane %v944, 5
      %v972 = vrot.slane %v971, 4
      %v973 = vrot.slane %v740, 5
      %v974 = vsel %vm531, %v972, %v973
      %v975 = vrot.slane %v945, 5
      %v976 = vrot.slane %v975, 4
      %v977 = vrot.slane %v742, 5
      %v978 = vsel %vm531, %v976, %v977
      %v979 = vrot.slane %v946, 5
      %v980 = vrot.slane %v979, 4
      %v981 = vrot.slane %v744, 5
      %v982 = vsel %vm531, %v980, %v981
      %v983 = vrot.slane %v947, 5
      %v984 = vrot.slane %v983, 4
      %v985 = vrot.slane %v746, 5
      %v986 = vsel %vm531, %v984, %v985
      %v987 = vrot.slane %v948, 5
      %v988 = vrot.slane %v987, 4
      %v989 = vrot.slane %v748, 5
      %v990 = vsel %vm531, %v988, %v989
      %v991 = vrot.slane %v949, 5
      %v992 = vrot.slane %v991, 4
      %v993 = vrot.slane %v750, 5
      %v994 = vsel %vm531, %v992, %v993
      %v995 = vrot.slane %v950, 5
      %v996 = vrot.slane %v995, 4
      %v997 = vrot.slane %v752, 5
      %v998 = vsel %vm531, %v996, %v997
      %s999 = scalar_lea.vmem %s1, 80
      %v1000 = vld [vmem:[%s999] sm:$0xf]
      %v1001 = vld [vmem:[%s999 + $0x4] sm:$0xf]
      %v1002 = vld [vmem:[%s999 + $0x8] sm:$0xf]
      %v1003 = vld [vmem:[%s999 + $0xc] sm:$0xf]
      %v1004 = vunpack.c.l.b16 %v970
      %v1005 = vunpack.c.l.b16 %v974
      %v1006 = vunpack.c.l.b16 %v978
      %v1007 = vunpack.c.l.b16 %v982
      %v1008 = vunpack.c.l.b16 %v986
      %v1009 = vunpack.c.l.b16 %v990
      %v1010 = vunpack.c.l.b16 %v994
      %v1011 = vunpack.c.l.b16 %v998
      %v1012 = vpack.c.b16 %v1005, %v1004
      %v1013 = vpack.c.b16 %v1007, %v1006
      %v1014 = vpack.c.b16 %v1009, %v1008
      %v1015 = vpack.c.b16 %v1011, %v1010
      %v1020 = vunpack.c.l.b16 %v1000
      %v1021 = vunpack.c.l.b16 %v1001
      %v1022 = vunpack.c.l.b16 %v1002
      %v1023 = vunpack.c.l.b16 %v1003
      %v1024 = vpack.c.b16 %v1021, %v1020
      %v1025 = vpack.c.b16 %v1023, %v1022
      %v1029 = vsel %vm390, %v1012, 0
      %v1032 = vsel %vm390, %v1013, 0
      %v1035 = vsel %vm390, %v1014, 0
      %v1038 = vsel %vm390, %v1015, 0
      %1040 = vmatpush.bf16.msra.mxu0 0
      %1041 = vmatpush.bf16.msra.mxu0 0
      %1042 = vmatpush.bf16.msra.mxu0 0
      %1043 = vmatpush.bf16.msra.mxu0 0
      %1044 = vmatpush.bf16.msra.mxu0 0
      %1045 = vmatpush.bf16.msra.mxu0 0
      %1046 = vmatpush.bf16.msra.mxu0 %v1025
      %1047 = vmatpush.bf16.msra.mxu0 %v1024
      %1048 = vmatmul.bf16.gmra.mxu0 %v1029
      %v1049 = vpop.f32.mrf.mxu0
      %v1050 = vadd.f32 0.0, %v1049
      %v1051 = vpop.f32.mrf.mxu0
      %v1052 = vadd.f32 0.0, %v1051
      %1053 = vmatmul.bf16.gmra.mxu0 %v1032
      %v1054 = vpop.f32.mrf.mxu0
      %v1055 = vadd.f32 0.0, %v1054
      %v1056 = vpop.f32.mrf.mxu0
      %v1057 = vadd.f32 0.0, %v1056
      %1058 = vmatmul.bf16.gmra.mxu0 %v1035
      %v1059 = vpop.f32.mrf.mxu0
      %v1060 = vadd.f32 0.0, %v1059
      %v1061 = vpop.f32.mrf.mxu0
      %v1062 = vadd.f32 0.0, %v1061
      %1063 = vmatmul.bf16.gmra.mxu0 %v1038
      %v1064 = vpop.f32.mrf.mxu0
      %v1065 = vadd.f32 0.0, %v1064
      %v1066 = vpop.f32.mrf.mxu0
      %v1067 = vadd.f32 0.0, %v1066
      %1068 = vdwg.mxu0
      %v1069 = vadd.f32 %v935, %v1050
      %v1070 = vadd.f32 %v936, %v1052
      %v1071 = vadd.f32 %v937, %v1055
      %v1072 = vadd.f32 %v938, %v1057
      %v1073 = vadd.f32 %v939, %v1060
      %v1074 = vadd.f32 %v940, %v1062
      %v1075 = vadd.f32 %v941, %v1065
      %v1076 = vadd.f32 %v942, %v1067
      %s1077 = scalar_lea.vmem %s219, 16
      %v1078 = vld [vmem:[%s1077] sm:$0xf]
      %v1079 = vld [vmem:[%s1077 + $0x8] sm:$0xf]
      %v1080 = vld [vmem:[%s1077 + $0x10] sm:$0xf]
      %v1081 = vld [vmem:[%s1077 + $0x18] sm:$0xf]
      %v1082 = vld [vmem:[%s1077 + $0x20] sm:$0xf]
      %v1083 = vld [vmem:[%s1077 + $0x28] sm:$0xf]
      %v1084 = vld [vmem:[%s1077 + $0x30] sm:$0xf]
      %v1085 = vld [vmem:[%s1077 + $0x38] sm:$0xf]
      %s1086 = scalar_lea.vmem %s1, 96
      %v1087 = vld [vmem:[%s1086] sm:$0xf]
      %v1088 = vld [vmem:[%s1086 + $0x4] sm:$0xf]
      %v1089 = vld [vmem:[%s1086 + $0x8] sm:$0xf]
      %v1090 = vld [vmem:[%s1086 + $0xc] sm:$0xf]
      %v1099 = vunpack.c.l.b16 %v1078
      %v1100 = vunpack.c.l.b16 %v1079
      %v1101 = vunpack.c.l.b16 %v1080
      %v1102 = vunpack.c.l.b16 %v1081
      %v1103 = vunpack.c.l.b16 %v1082
      %v1104 = vunpack.c.l.b16 %v1083
      %v1105 = vunpack.c.l.b16 %v1084
      %v1106 = vunpack.c.l.b16 %v1085
      %v1107 = vpack.c.b16 %v1100, %v1099
      %v1108 = vpack.c.b16 %v1102, %v1101
      %v1109 = vpack.c.b16 %v1104, %v1103
      %v1110 = vpack.c.b16 %v1106, %v1105
      %v1115 = vunpack.c.l.b16 %v1087
      %v1116 = vunpack.c.l.b16 %v1088
      %v1117 = vunpack.c.l.b16 %v1089
      %v1118 = vunpack.c.l.b16 %v1090
      %v1119 = vpack.c.b16 %v1116, %v1115
      %v1120 = vpack.c.b16 %v1118, %v1117
      %v1124 = vsel %vm390, %v1107, 0
      %v1127 = vsel %vm390, %v1108, 0
      %v1130 = vsel %vm390, %v1109, 0
      %v1133 = vsel %vm390, %v1110, 0
      %1135 = vmatpush.bf16.msra.mxu0 0
      %1136 = vmatpush.bf16.msra.mxu0 0
      %1137 = vmatpush.bf16.msra.mxu0 0
      %1138 = vmatpush.bf16.msra.mxu0 0
      %1139 = vmatpush.bf16.msra.mxu0 0
      %1140 = vmatpush.bf16.msra.mxu0 0
      %1141 = vmatpush.bf16.msra.mxu0 %v1120
      %1142 = vmatpush.bf16.msra.mxu0 %v1119
      %1143 = vmatmul.bf16.gmra.mxu0 %v1124
      %v1144 = vpop.f32.mrf.mxu0
      %v1145 = vadd.f32 0.0, %v1144
      %v1146 = vpop.f32.mrf.mxu0
      %v1147 = vadd.f32 0.0, %v1146
      %1148 = vmatmul.bf16.gmra.mxu0 %v1127
      %v1149 = vpop.f32.mrf.mxu0
      %v1150 = vadd.f32 0.0, %v1149
      %v1151 = vpop.f32.mrf.mxu0
      %v1152 = vadd.f32 0.0, %v1151
      %1153 = vmatmul.bf16.gmra.mxu0 %v1130
      %v1154 = vpop.f32.mrf.mxu0
      %v1155 = vadd.f32 0.0, %v1154
      %v1156 = vpop.f32.mrf.mxu0
      %v1157 = vadd.f32 0.0, %v1156
      %1158 = vmatmul.bf16.gmra.mxu0 %v1133
      %v1159 = vpop.f32.mrf.mxu0
      %v1160 = vadd.f32 0.0, %v1159
      %v1161 = vpop.f32.mrf.mxu0
      %v1162 = vadd.f32 0.0, %v1161
      %1163 = vdwg.mxu0
      %v1164 = vadd.f32 %v1069, %v1145
      %v1165 = vadd.f32 %v1070, %v1147
      %v1166 = vadd.f32 %v1071, %v1150
      %v1167 = vadd.f32 %v1072, %v1152
      %v1168 = vadd.f32 %v1073, %v1155
      %v1169 = vadd.f32 %v1074, %v1157
      %v1170 = vadd.f32 %v1075, %v1160
      %v1171 = vadd.f32 %v1076, %v1162
      %v1172 = vld [vmem:[%s1077] sm:$0xf]
      %v1173 = vld [vmem:[%s1077 + $0x4] sm:$0x1]
      %v1174 = vld [vmem:[%s1077 + $0x8] sm:$0xf]
      %v1175 = vld [vmem:[%s1077 + $0xc] sm:$0x1]
      %v1176 = vld [vmem:[%s1077 + $0x10] sm:$0xf]
      %v1177 = vld [vmem:[%s1077 + $0x14] sm:$0x1]
      %v1178 = vld [vmem:[%s1077 + $0x18] sm:$0xf]
      %v1179 = vld [vmem:[%s1077 + $0x1c] sm:$0x1]
      %v1180 = vld [vmem:[%s1077 + $0x20] sm:$0xf]
      %v1181 = vld [vmem:[%s1077 + $0x24] sm:$0x1]
      %v1182 = vld [vmem:[%s1077 + $0x28] sm:$0xf]
      %v1183 = vld [vmem:[%s1077 + $0x2c] sm:$0x1]
      %v1184 = vld [vmem:[%s1077 + $0x30] sm:$0xf]
      %v1185 = vld [vmem:[%s1077 + $0x34] sm:$0x1]
      %v1186 = vld [vmem:[%s1077 + $0x38] sm:$0xf]
      %v1187 = vld [vmem:[%s1077 + $0x3c] sm:$0x1]
      %v1189 = vshrl.u32 %v1172, 16
      %v1191 = vrot.slane %v1189, 4
      %v1192 = vshll.u32 %v1172, 16
      %v1194 = vrot.slane %v1192, 5
      %v1195 = vor.u32 %v1191, %v1194
      %v1196 = vrot.slane %v1195, 4
      %v1198 = vshll.u32 %v1173, 16
      %v1200 = vrot.slane %v1198, 5
      %v1201 = vsel %vm248, %v1196, %v1200
      %v1203 = vshrl.u32 %v1174, 16
      %v1205 = vrot.slane %v1203, 4
      %v1206 = vshll.u32 %v1174, 16
      %v1208 = vrot.slane %v1206, 5
      %v1209 = vor.u32 %v1205, %v1208
      %v1210 = vrot.slane %v1209, 4
      %v1212 = vshll.u32 %v1175, 16
      %v1214 = vrot.slane %v1212, 5
      %v1215 = vsel %vm248, %v1210, %v1214
      %v1217 = vshrl.u32 %v1176, 16
      %v1219 = vrot.slane %v1217, 4
      %v1220 = vshll.u32 %v1176, 16
      %v1222 = vrot.slane %v1220, 5
      %v1223 = vor.u32 %v1219, %v1222
      %v1224 = vrot.slane %v1223, 4
      %v1226 = vshll.u32 %v1177, 16
      %v1228 = vrot.slane %v1226, 5
      %v1229 = vsel %vm248, %v1224, %v1228
      %v1231 = vshrl.u32 %v1178, 16
      %v1233 = vrot.slane %v1231, 4
      %v1234 = vshll.u32 %v1178, 16
      %v1236 = vrot.slane %v1234, 5
      %v1237 = vor.u32 %v1233, %v1236
      %v1238 = vrot.slane %v1237, 4
      %v1240 = vshll.u32 %v1179, 16
      %v1242 = vrot.slane %v1240, 5
      %v1243 = vsel %vm248, %v1238, %v1242
      %v1245 = vshrl.u32 %v1180, 16
      %v1247 = vrot.slane %v1245, 4
      %v1248 = vshll.u32 %v1180, 16
      %v1250 = vrot.slane %v1248, 5
      %v1251 = vor.u32 %v1247, %v1250
      %v1252 = vrot.slane %v1251, 4
      %v1254 = vshll.u32 %v1181, 16
      %v1256 = vrot.slane %v1254, 5
      %v1257 = vsel %vm248, %v1252, %v1256
      %v1259 = vshrl.u32 %v1182, 16
      %v1261 = vrot.slane %v1259, 4
      %v1262 = vshll.u32 %v1182, 16
      %v1264 = vrot.slane %v1262, 5
      %v1265 = vor.u32 %v1261, %v1264
      %v1266 = vrot.slane %v1265, 4
      %v1268 = vshll.u32 %v1183, 16
      %v1270 = vrot.slane %v1268, 5
      %v1271 = vsel %vm248, %v1266, %v1270
      %v1273 = vshrl.u32 %v1184, 16
      %v1275 = vrot.slane %v1273, 4
      %v1276 = vshll.u32 %v1184, 16
      %v1278 = vrot.slane %v1276, 5
      %v1279 = vor.u32 %v1275, %v1278
      %v1280 = vrot.slane %v1279, 4
      %v1282 = vshll.u32 %v1185, 16
      %v1284 = vrot.slane %v1282, 5
      %v1285 = vsel %vm248, %v1280, %v1284
      %v1287 = vshrl.u32 %v1186, 16
      %v1289 = vrot.slane %v1287, 4
      %v1290 = vshll.u32 %v1186, 16
      %v1292 = vrot.slane %v1290, 5
      %v1293 = vor.u32 %v1289, %v1292
      %v1294 = vrot.slane %v1293, 4
      %v1296 = vshll.u32 %v1187, 16
      %v1298 = vrot.slane %v1296, 5
      %v1299 = vsel %vm248, %v1294, %v1298
      %s1300 = scalar_lea.vmem %s1, 112
      %v1301 = vld [vmem:[%s1300] sm:$0xf]
      %v1302 = vld [vmem:[%s1300 + $0x4] sm:$0xf]
      %v1303 = vld [vmem:[%s1300 + $0x8] sm:$0xf]
      %v1304 = vld [vmem:[%s1300 + $0xc] sm:$0xf]
      %v1305 = vunpack.c.l.b16 %v1201
      %v1306 = vunpack.c.l.b16 %v1215
      %v1307 = vunpack.c.l.b16 %v1229
      %v1308 = vunpack.c.l.b16 %v1243
      %v1309 = vunpack.c.l.b16 %v1257
      %v1310 = vunpack.c.l.b16 %v1271
      %v1311 = vunpack.c.l.b16 %v1285
      %v1312 = vunpack.c.l.b16 %v1299
      %v1313 = vpack.c.b16 %v1306, %v1305
      %v1314 = vpack.c.b16 %v1308, %v1307
      %v1315 = vpack.c.b16 %v1310, %v1309
      %v1316 = vpack.c.b16 %v1312, %v1311
      %v1321 = vunpack.c.l.b16 %v1301
      %v1322 = vunpack.c.l.b16 %v1302
      %v1323 = vunpack.c.l.b16 %v1303
      %v1324 = vunpack.c.l.b16 %v1304
      %v1325 = vpack.c.b16 %v1322, %v1321
      %v1326 = vpack.c.b16 %v1324, %v1323
      %v1330 = vsel %vm390, %v1313, 0
      %v1333 = vsel %vm390, %v1314, 0
      %v1336 = vsel %vm390, %v1315, 0
      %v1339 = vsel %vm390, %v1316, 0
      %1341 = vmatpush.bf16.msra.mxu0 0
      %1342 = vmatpush.bf16.msra.mxu0 0
      %1343 = vmatpush.bf16.msra.mxu0 0
      %1344 = vmatpush.bf16.msra.mxu0 0
      %1345 = vmatpush.bf16.msra.mxu0 0
      %1346 = vmatpush.bf16.msra.mxu0 0
      %1347 = vmatpush.bf16.msra.mxu0 %v1326
      %1348 = vmatpush.bf16.msra.mxu0 %v1325
      %1349 = vmatmul.bf16.gmra.mxu0 %v1330
      %v1350 = vpop.f32.mrf.mxu0
      %v1351 = vadd.f32 0.0, %v1350
      %v1352 = vpop.f32.mrf.mxu0
      %v1353 = vadd.f32 0.0, %v1352
      %1354 = vmatmul.bf16.gmra.mxu0 %v1333
      %v1355 = vpop.f32.mrf.mxu0
      %v1356 = vadd.f32 0.0, %v1355
      %v1357 = vpop.f32.mrf.mxu0
      %v1358 = vadd.f32 0.0, %v1357
      %1359 = vmatmul.bf16.gmra.mxu0 %v1336
      %v1360 = vpop.f32.mrf.mxu0
      %v1361 = vadd.f32 0.0, %v1360
      %v1362 = vpop.f32.mrf.mxu0
      %v1363 = vadd.f32 0.0, %v1362
      %1364 = vmatmul.bf16.gmra.mxu0 %v1339
      %v1365 = vpop.f32.mrf.mxu0
      %v1366 = vadd.f32 0.0, %v1365
      %v1367 = vpop.f32.mrf.mxu0
      %v1368 = vadd.f32 0.0, %v1367
      %1369 = vdwg.mxu0
      %v1370 = vadd.f32 %v1164, %v1351
      %v1371 = vadd.f32 %v1165, %v1353
      %v1372 = vadd.f32 %v1166, %v1356
      %v1373 = vadd.f32 %v1167, %v1358
      %v1374 = vadd.f32 %v1168, %v1361
      %v1375 = vadd.f32 %v1169, %v1363
      %v1376 = vadd.f32 %v1170, %v1366
      %v1377 = vadd.f32 %v1171, %v1368
      %v1378 = vld [vmem:[%s1077] sm:$0xe]
      %v1379 = vld [vmem:[%s1077 + $0x8] sm:$0xe]
      %v1380 = vld [vmem:[%s1077 + $0x10] sm:$0xe]
      %v1381 = vld [vmem:[%s1077 + $0x18] sm:$0xe]
      %v1382 = vld [vmem:[%s1077 + $0x20] sm:$0xe]
      %v1383 = vld [vmem:[%s1077 + $0x28] sm:$0xe]
      %v1384 = vld [vmem:[%s1077 + $0x30] sm:$0xe]
      %v1385 = vld [vmem:[%s1077 + $0x38] sm:$0xe]
      %v1402 = vrot.slane %v1378, 5
      %v1403 = vrot.slane %v1402, 4
      %v1404 = vrot.slane %v1173, 5
      %v1405 = vsel %vm531, %v1403, %v1404
      %v1406 = vrot.slane %v1379, 5
      %v1407 = vrot.slane %v1406, 4
      %v1408 = vrot.slane %v1175, 5
      %v1409 = vsel %vm531, %v1407, %v1408
      %v1410 = vrot.slane %v1380, 5
      %v1411 = vrot.slane %v1410, 4
      %v1412 = vrot.slane %v1177, 5
      %v1413 = vsel %vm531, %v1411, %v1412
      %v1414 = vrot.slane %v1381, 5
      %v1415 = vrot.slane %v1414, 4
      %v1416 = vrot.slane %v1179, 5
      %v1417 = vsel %vm531, %v1415, %v1416
      %v1418 = vrot.slane %v1382, 5
      %v1419 = vrot.slane %v1418, 4
      %v1420 = vrot.slane %v1181, 5
      %v1421 = vsel %vm531, %v1419, %v1420
      %v1422 = vrot.slane %v1383, 5
      %v1423 = vrot.slane %v1422, 4
      %v1424 = vrot.slane %v1183, 5
      %v1425 = vsel %vm531, %v1423, %v1424
      %v1426 = vrot.slane %v1384, 5
      %v1427 = vrot.slane %v1426, 4
      %v1428 = vrot.slane %v1185, 5
      %v1429 = vsel %vm531, %v1427, %v1428
      %v1430 = vrot.slane %v1385, 5
      %v1431 = vrot.slane %v1430, 4
      %v1432 = vrot.slane %v1187, 5
      %v1433 = vsel %vm531, %v1431, %v1432
      %s1434 = scalar_lea.vmem %s1, 128
      %v1435 = vld [vmem:[%s1434] sm:$0xf]
      %v1436 = vld [vmem:[%s1434 + $0x4] sm:$0xf]
      %v1437 = vld [vmem:[%s1434 + $0x8] sm:$0xf]
      %v1438 = vld [vmem:[%s1434 + $0xc] sm:$0xf]
      %v1439 = vunpack.c.l.b16 %v1405
      %v1440 = vunpack.c.l.b16 %v1409
      %v1441 = vunpack.c.l.b16 %v1413
      %v1442 = vunpack.c.l.b16 %v1417
      %v1443 = vunpack.c.l.b16 %v1421
      %v1444 = vunpack.c.l.b16 %v1425
      %v1445 = vunpack.c.l.b16 %v1429
      %v1446 = vunpack.c.l.b16 %v1433
      %v1447 = vpack.c.b16 %v1440, %v1439
      %v1448 = vpack.c.b16 %v1442, %v1441
      %v1449 = vpack.c.b16 %v1444, %v1443
      %v1450 = vpack.c.b16 %v1446, %v1445
      %v1455 = vunpack.c.l.b16 %v1435
      %v1456 = vunpack.c.l.b16 %v1436
      %v1457 = vunpack.c.l.b16 %v1437
      %v1458 = vunpack.c.l.b16 %v1438
      %v1459 = vpack.c.b16 %v1456, %v1455
      %v1460 = vpack.c.b16 %v1458, %v1457
      %v1464 = vsel %vm390, %v1447, 0
      %v1467 = vsel %vm390, %v1448, 0
      %v1470 = vsel %vm390, %v1449, 0
      %v1473 = vsel %vm390, %v1450, 0
      %1475 = vmatpush.bf16.msra.mxu0 0
      %1476 = vmatpush.bf16.msra.mxu0 0
      %1477 = vmatpush.bf16.msra.mxu0 0
      %1478 = vmatpush.bf16.msra.mxu0 0
      %1479 = vmatpush.bf16.msra.mxu0 0
      %1480 = vmatpush.bf16.msra.mxu0 0
      %1481 = vmatpush.bf16.msra.mxu0 %v1460
      %1482 = vmatpush.bf16.msra.mxu0 %v1459
      %1483 = vmatmul.bf16.gmra.mxu0 %v1464
      %v1484 = vpop.f32.mrf.mxu0
      %v1485 = vadd.f32 0.0, %v1484
      %v1486 = vpop.f32.mrf.mxu0
      %v1487 = vadd.f32 0.0, %v1486
      %1488 = vmatmul.bf16.gmra.mxu0 %v1467
      %v1489 = vpop.f32.mrf.mxu0
      %v1490 = vadd.f32 0.0, %v1489
      %v1491 = vpop.f32.mrf.mxu0
      %v1492 = vadd.f32 0.0, %v1491
      %1493 = vmatmul.bf16.gmra.mxu0 %v1470
      %v1494 = vpop.f32.mrf.mxu0
      %v1495 = vadd.f32 0.0, %v1494
      %v1496 = vpop.f32.mrf.mxu0
      %v1497 = vadd.f32 0.0, %v1496
      %1498 = vmatmul.bf16.gmra.mxu0 %v1473
      %v1499 = vpop.f32.mrf.mxu0
      %v1500 = vadd.f32 0.0, %v1499
      %v1501 = vpop.f32.mrf.mxu0
      %v1502 = vadd.f32 0.0, %v1501
      %1503 = vdwg.mxu0
      %v1504 = vadd.f32 %v1370, %v1485
      %v1505 = vadd.f32 %v1371, %v1487
      %v1506 = vadd.f32 %v1372, %v1490
      %v1507 = vadd.f32 %v1373, %v1492
      %v1508 = vadd.f32 %v1374, %v1495
      %v1509 = vadd.f32 %v1375, %v1497
      %v1510 = vadd.f32 %v1376, %v1500
      %v1511 = vadd.f32 %v1377, %v1502
      %v1512 = vld [vmem:[%s2] sm:$0x1]
      %v1514 = vperm.slane %v1512, 0
      %v1516 = vadd.f32 %v1504, %v1514
      %v1517 = vadd.f32 %v1505, %v1514
      %v1518 = vadd.f32 %v1506, %v1514
      %v1519 = vadd.f32 %v1507, %v1514
      %v1520 = vadd.f32 %v1508, %v1514
      %v1521 = vadd.f32 %v1509, %v1514
      %v1522 = vadd.f32 %v1510, %v1514
      %v1523 = vadd.f32 %v1511, %v1514
      %v1524 = vmax.f32 %v1516, 0.0
      %v1525 = vmax.f32 %v1517, 0.0
      %v1526 = vmax.f32 %v1518, 0.0
      %v1527 = vmax.f32 %v1519, 0.0
      %v1528 = vmax.f32 %v1520, 0.0
      %v1529 = vmax.f32 %v1521, 0.0
      %v1530 = vmax.f32 %v1522, 0.0
      %v1531 = vmax.f32 %v1523, 0.0
      %v1532 = vpack.c.bf16 %v1525, %v1524
      %v1533 = vpack.c.bf16 %v1527, %v1526
      %v1534 = vpack.c.bf16 %v1529, %v1528
      %v1535 = vpack.c.bf16 %v1531, %v1530
      %v1536 = vld [vmem:[%s3] sm:$0xf]
      %v1537 = vld [vmem:[%s3 + $0x4] sm:$0xf]
      %v1538 = vld [vmem:[%s3 + $0x8] sm:$0xf]
      %v1539 = vld [vmem:[%s3 + $0xc] sm:$0xf]
      %v1540 = vld [vmem:[%s4] sm:$0x1]
      %v1542 = vperm.slane %v1540, 0
      %v1548 = vunpack.c.l.b16 %v1536
      %v1549 = vunpack.c.l.b16 %v1537
      %v1550 = vunpack.c.l.b16 %v1538
      %v1551 = vunpack.c.l.b16 %v1539
      %v1552 = vpack.c.b16 %v1549, %v1548
      %v1553 = vpack.c.b16 %v1551, %v1550
      %v1557 = vsel %vm390, %v1532, 0
      %v1560 = vsel %vm390, %v1533, 0
      %v1563 = vsel %vm390, %v1534, 0
      %v1566 = vsel %vm390, %v1535, 0
      %1568 = vmatpush.bf16.msra.mxu0 0
      %1569 = vmatpush.bf16.msra.mxu0 0
      %1570 = vmatpush.bf16.msra.mxu0 0
      %1571 = vmatpush.bf16.msra.mxu0 0
      %1572 = vmatpush.bf16.msra.mxu0 0
      %1573 = vmatpush.bf16.msra.mxu0 0
      %1574 = vmatpush.bf16.msra.mxu0 %v1553
      %1575 = vmatpush.bf16.msra.mxu0 %v1552
      %1576 = vmatmul.bf16.gmra.mxu0 %v1557
      %v1577 = vpop.f32.mrf.mxu0
      %v1578 = vadd.f32 %v1542, %v1577
      %v1579 = vpop.f32.mrf.mxu0
      %v1580 = vadd.f32 %v1542, %v1579
      %1581 = vmatmul.bf16.gmra.mxu0 %v1560
      %v1582 = vpop.f32.mrf.mxu0
      %v1583 = vadd.f32 %v1542, %v1582
      %v1584 = vpop.f32.mrf.mxu0
      %v1585 = vadd.f32 %v1542, %v1584
      %1586 = vmatmul.bf16.gmra.mxu0 %v1563
      %v1587 = vpop.f32.mrf.mxu0
      %v1588 = vadd.f32 %v1542, %v1587
      %v1589 = vpop.f32.mrf.mxu0
      %v1590 = vadd.f32 %v1542, %v1589
      %1591 = vmatmul.bf16.gmra.mxu0 %v1566
      %v1592 = vpop.f32.mrf.mxu0
      %v1593 = vadd.f32 %v1542, %v1592
      %v1594 = vpop.f32.mrf.mxu0
      %v1595 = vadd.f32 %v1542, %v1594
      %1596 = vdwg.mxu0
      %1597 = vst [vmem:[%s224] sm:$0xff] %v1578
      %1598 = vst [vmem:[%s224 + $0x8] sm:$0xff] %v1580
      %1599 = vst [vmem:[%s224 + $0x10] sm:$0xff] %v1583
      %1600 = vst [vmem:[%s224 + $0x18] sm:$0xff] %v1585
      %1601 = vst [vmem:[%s224 + $0x20] sm:$0xff] %v1588
      %1602 = vst [vmem:[%s224 + $0x28] sm:$0xff] %v1590
      %1603 = vst [vmem:[%s224 + $0x30] sm:$0xff] %v1593
      %1604 = vst [vmem:[%s224 + $0x38] sm:$0xff] %v1595
      %p1605 = scmp.lt.s32.totalorder %s16, 1
      %s1606 = scalar_select %p1605, %s16, 1
      %s1607 = smul.addr %s1606, 8
      %s1608 = smul.addr %s1607, 8
      %s1609 = scalar_lea.vmem %s5, %s1608
      // Predicated region
      $region41: #{detection_and_segmentation_forward.4} parent=39 // pred_check
        %p1610 = pneg %p144
      $region42: #{detection_and_segmentation_forward.4} parent=39 // pred_check_branch
        %1612 = sbr.rel (%p1610) target = $region44
      $region43: #{detection_and_segmentation_forward.4} parent=39 // pred_region
        _
      $region44: #{detection_and_segmentation_forward.4} parent=39 // pred_fallthru
        _
    $region40: #{detection_and_segmentation_forward.4} parent=5 // pred_fallthru
      _
    %p1613 = scmp.le.s32.totalorder 2, %s11
    // Predicated region
    $region45: #{detection_and_segmentation_forward.4} parent=5 // pred_check
      %p1614 = pneg %p1613
    $region46: #{detection_and_segmentation_forward.4} parent=5 // pred_check_branch
      %1616 = sbr.rel (%p1614) target = $region48
    $region47: #{detection_and_segmentation_forward.4} parent=5 // pred_region
      %s1617 = ssub.s32 %s11, 2
      // Predicated region
      $region49: #{detection_and_segmentation_forward.4} parent=47 // pred_check
        %p1618 = pneg %p150
      $region50: #{detection_and_segmentation_forward.4} parent=47 // pred_check_branch
        %1620 = sbr.rel (%p1618) target = $region52
      $region51: #{detection_and_segmentation_forward.4} parent=47 // pred_region
        %p1621 = scmp.lt.s32.totalorder %s17, 1
        %s1622 = scalar_select %p1621, %s17, 1
        %s1623 = smul.addr %s1622, 8
        %s1624 = smul.addr %s1623, 8
        %s1625 = scalar_lea.vmem %s5, %s1624
      $region52: #{detection_and_segmentation_forward.4} parent=47 // pred_fallthru
        _
    $region48: #{detection_and_segmentation_forward.4} parent=5 // pred_fallthru
      _
  $region6: #{detection_and_segmentation_forward.4} parent=0 // loop_footer
    %s15 = sadd.s32 1, %s11
  $region7: #{detection_and_segmentation_forward.4} parent=0 // loop_footer_branch
    %10 = sbr.rel target = $region3
  $region8: #{detection_and_segmentation_forward.4} parent=0 // loop_exit
    _

</llo_original>
